<compile_context>
chip_gen: v7x
topology: tpu7x:2x2x1
jax: 0.10.0
libtpu: 0.0.40
codegen_flags: <defaults>
</compile_context>

<pallas_src>
import functools

import jax
import jax.numpy as jnp
from jax import lax
from jax.experimental import pallas as pl
from jax.experimental.pallas import tpu as pltpu


# ---------------------------------------------------------------------------
# feature / hardware probes
# ---------------------------------------------------------------------------
@functools.lru_cache(maxsize=None)
def _single_buffer_ok():
    """True iff this JAX/Mosaic build accepts pipeline_mode=pl.Buffered(1) on an
    input BlockSpec (used to single-buffer replicated weight operands)."""
    if not hasattr(pl, "Buffered"):
        return False

    def _copy(x_ref, o_ref):
        o_ref[...] = x_ref[...]

    try:
        f = pl.pallas_call(
            _copy,
            out_shape=jax.ShapeDtypeStruct((8, 128), jnp.float32),
            grid=(1,),
            in_specs=[pl.BlockSpec((8, 128), lambda i: (0, 0),
                                   pipeline_mode=pl.Buffered(1))],
            out_specs=pl.BlockSpec((8, 128), lambda i: (0, 0)),
        )
        jax.block_until_ready(f(jnp.zeros((8, 128), jnp.float32)))
        return True
    except Exception:
        return False


@functools.lru_cache(maxsize=None)
def _vmem_limit_bytes():
    """Scoped-VMEM limit: 64 MiB on v5e/v6e (128 MiB physical), ~48 MiB on v7x
    (64 MiB physical per TensorCore), leaving compiler-scratch headroom."""
    try:
        cap = int(pltpu.get_tpu_info().vmem_capacity_bytes)
    except Exception:
        cap = 128 * 1024 * 1024
    return min(64 * 1024 * 1024, (cap * 3) // 4)


def _pick_block_b(B, N):
    """Largest divisor TB of B with TB*N <= 256: flattens batch rows into the
    GEMM M dim to feed the 256-wide MXU and amortize per-grid-step overhead."""
    tb = 1
    for cand in range(1, B + 1):
        if B % cand == 0 and cand * N <= 256:
            tb = cand
    return tb


# ---------------------------------------------------------------------------
# kernel
# ---------------------------------------------------------------------------
def _transformer_layer_kernel(x_ref, ln1w_ref, ln1b_ref, wqkv_ref,
                              wp_ref, bp_ref, ln2w_ref, ln2b_ref,
                              w1_ref, b1_ref, w2_ref, b2_ref, o_ref,
                              acc_ref,
                              *, num_heads, eps=1e-5):
    tb, n, c = x_ref.shape
    m = tb * n
    hd = c // num_heads
    scale = float(hd) ** -0.5

    x2 = x_ref[...].reshape(m, c)                       # (M, C) f32

    # ---- LayerNorm 1 (PyTorch: biased variance, eps=1e-5) -- f32 math ----
    mu = jnp.mean(x2, axis=-1, keepdims=True)
    var = jnp.mean((x2 - mu) ** 2, axis=-1, keepdims=True)
    xn = (x2 - mu) * lax.rsqrt(var + eps)
    xn = xn * ln1w_ref[0] + ln1b_ref[0]

    # ---- fused Q/K/V projection: one (M,C) @ (C,3C) bf16 MXU op ----
    # column layout: [0:C]=queries, [C:2C]=keys, [2C:3C]=values (matches the
    # PyTorch reshape (b, m, 2, heads, hd) split).
    qkv = jnp.dot(xn.astype(jnp.bfloat16), wqkv_ref[...],
                  preferred_element_type=jnp.float32)   # (M, 3C) f32

    # ---- per-head attention, head outputs folded into the output projection.
    # Each accumulation is a full-C lane-dense store (no masked sub-128 vst).
    acc_ref[...] = jnp.zeros_like(acc_ref)
    for bi in range(tb):                                # static batch-row loop
        r0 = bi * n
        for h in range(num_heads):                      # static head loop
            lo = h * hd
            qh = (qkv[r0:r0 + n, lo:lo + hd] * scale).astype(jnp.bfloat16)
            kh = qkv[r0:r0 + n, c + lo:c + lo + hd].astype(jnp.bfloat16)
            vh = qkv[r0:r0 + n, 2 * c + lo:2 * c + lo + hd].astype(jnp.bfloat16)
            # scores: contract over hd (rhs transposed), f32 accumulation
            s = lax.dot_general(qh, kh, (((1,), (1,)), ((), ())),
                                preferred_element_type=jnp.float32)  # (N, N)
            # numerically stable softmax over keys, f32
            s = s - jnp.max(s, axis=-1, keepdims=True)
            p = jnp.exp(s)
            denom = jnp.sum(p, axis=-1, keepdims=True)
            p = p * pl.reciprocal(denom, approx=True)                # EUP slot
            oh = jnp.dot(p.astype(jnp.bfloat16), vh,
                         preferred_element_type=jnp.float32)         # (N, hd)
            # fold this head straight into the projection (hd rows of Wp)
            acc_ref[r0:r0 + n, :] += jnp.dot(
                oh.astype(jnp.bfloat16), wp_ref[lo:lo + hd, :],
                preferred_element_type=jnp.float32)                  # (N, C)

    # ---- projection bias + residual 1 ----
    h1 = x2 + acc_ref[...] + bp_ref[0]

    # ---- LayerNorm 2 -- f32 math ----
    mu2 = jnp.mean(h1, axis=-1, keepdims=True)
    var2 = jnp.mean((h1 - mu2) ** 2, axis=-1, keepdims=True)
    hn = (h1 - mu2) * lax.rsqrt(var2 + eps)
    hn = hn * ln2w_ref[0] + ln2b_ref[0]

    # ---- MLP (fc1 -> relu -> fc2), bf16 operands / f32 accumulation ----
    z = jnp.dot(hn.astype(jnp.bfloat16), w1_ref[...],
                preferred_element_type=jnp.float32) + b1_ref[0]
    z = jnp.maximum(z, 0.0)
    z = jnp.dot(z.astype(jnp.bfloat16), w2_ref[...],
                preferred_element_type=jnp.float32) + b2_ref[0]

    o_ref[...] = (h1 + z).reshape(tb, n, c).astype(o_ref.dtype)   # residual 2


# ---------------------------------------------------------------------------
# wrapper
# ---------------------------------------------------------------------------
def transformer_layer(x, pk, num_heads):
    B, N, C = x.shape
    Hm = pk["w1"].shape[1]
    TB = _pick_block_b(B, N)

    single_buf = _single_buffer_ok()

    def rep(shape):  # constant-index (replicated) operand, single-buffered
        if single_buf:
            return pl.BlockSpec(shape, lambda i: (0, 0),
                                pipeline_mode=pl.Buffered(1))
        return pl.BlockSpec(shape, lambda i: (0, 0))

    # Advisory cost estimate for XLA's scheduler.
    flops = 2 * B * N * (4 * C * C + 2 * N * C + 2 * C * Hm)
    transcendentals = B * num_heads * N * N + 4 * B * N
    bytes_accessed = (2 * B * N * C * 4                    # x in + out (f32)
                      + (4 * C * C + 2 * C * Hm) * 2       # bf16 weights
                      + (4 * C + Hm) * 4)                  # biases + LN params

    kernel = functools.partial(_transformer_layer_kernel, num_heads=num_heads)
    return pl.pallas_call(
        kernel,
        out_shape=jax.ShapeDtypeStruct((B, N, C), x.dtype),
        grid=(B // TB,),
        in_specs=[
            pl.BlockSpec((TB, N, C), lambda i: (i, 0, 0)),  # x
            rep((1, C)), rep((1, C)),                       # ln1 w, b
            rep((C, 3 * C)),                                # fused Wqkv^T (bf16)
            rep((C, C)), rep((1, C)),                       # Wp^T (bf16), bp
            rep((1, C)), rep((1, C)),                       # ln2 w, b
            rep((C, Hm)), rep((1, Hm)),                     # W1^T (bf16), b1
            rep((Hm, C)), rep((1, C)),                      # W2^T (bf16), b2
        ],
        out_specs=pl.BlockSpec((TB, N, C), lambda i: (i, 0, 0)),
        scratch_shapes=[pltpu.VMEM((TB * N, C), jnp.float32)],  # proj accumulator
        compiler_params=pltpu.CompilerParams(
            dimension_semantics=("parallel",),
            vmem_limit_bytes=_vmem_limit_bytes()),
        cost_estimate=pl.CostEstimate(
            flops=flops, transcendentals=transcendentals,
            bytes_accessed=bytes_accessed),
    )(x, pk["ln1_w"], pk["ln1_b"], pk["wqkv"], pk["wp"], pk["bp"],
      pk["ln2_w"], pk["ln2_b"], pk["w1"], pk["b1"], pk["w2"], pk["b2"])


def transformer_forward(x, packed_layer_params, num_heads):
    # enc_dec=False, y=None, mask=None  =>  each layer is pure self-attention.
    for pk in packed_layer_params:
        x = transformer_layer(x, pk, num_heads)
    return x


# ---------- parameter init (raw, PyTorch-like) and one-time prepack ----------
def init_layer_params(key, dim_self, mlp_ratio):
    C = dim_self
    H = int(C * mlp_ratio)
    ks = jax.random.split(key, 8)
    s = 0.02
    return {
        "ln1_w": jnp.ones((1, C), jnp.float32),
        "ln1_b": jnp.zeros((1, C), jnp.float32),
        "wq_t": s * jax.random.normal(ks[0], (C, C), jnp.float32),
        "wkv_t": s * jax.random.normal(ks[1], (C, 2 * C), jnp.float32),
        "wp_t": s * jax.random.normal(ks[2], (C, C), jnp.float32),
        "bp": s * jax.random.normal(ks[3], (1, C), jnp.float32),
        "ln2_w": jnp.ones((1, C), jnp.float32),
        "ln2_b": jnp.zeros((1, C), jnp.float32),
        "w1_t": s * jax.random.normal(ks[4], (C, H), jnp.float32),
        "b1": s * jax.random.normal(ks[5], (1, H), jnp.float32),
        "w2_t": s * jax.random.normal(ks[6], (H, C), jnp.float32),
        "b2": s * jax.random.normal(ks[7], (1, C), jnp.float32),
    }


def pack_layer_params(p):
    """Done ONCE, outside the forward loop: fuse Q/KV and cast MXU weights to
    bf16 so no per-call HBM convert/concat traffic remains."""
    return {
        "ln1_w": p["ln1_w"], "ln1_b": p["ln1_b"],
        "wqkv": jnp.concatenate([p["wq_t"], p["wkv_t"]], axis=1).astype(jnp.bfloat16),
        "wp": p["wp_t"].astype(jnp.bfloat16), "bp": p["bp"],
        "ln2_w": p["ln2_w"], "ln2_b": p["ln2_b"],
        "w1": p["w1_t"].astype(jnp.bfloat16), "b1": p["b1"],
        "w2": p["w2_t"].astype(jnp.bfloat16), "b2": p["b2"],
    }


# ---------- pure-JAX reference (mirrors the PyTorch forward, f32) ----------
def _ref_layer(x, p, num_heads, eps=1e-5):
    B, N, C = x.shape
    hd = C // num_heads

    def ln(t, w, b):
        mu = jnp.mean(t, axis=-1, keepdims=True)
        var = jnp.mean((t - mu) ** 2, axis=-1, keepdims=True)
        return (t - mu) / jnp.sqrt(var + eps) * w[0] + b[0]

    xn = ln(x, p["ln1_w"], p["ln1_b"])
    q = (xn @ p["wq_t"]).reshape(B, N, num_heads, hd)
    kv = (xn @ p["wkv_t"]).reshape(B, N, 2, num_heads, hd)
    k, v = kv[:, :, 0], kv[:, :, 1]
    att = jnp.einsum("bnhd,bmhd->bnmh", q, k) * (hd ** -0.5)
    att = jax.nn.softmax(att, axis=2)
    out = jnp.einsum("bnmh,bmhd->bnhd", att, v).reshape(B, N, C)
    out = out @ p["wp_t"] + p["bp"][0]
    h1 = x + out
    hn = ln(h1, p["ln2_w"], p["ln2_b"])
    z = jnp.maximum(hn @ p["w1_t"] + p["b1"][0], 0.0) @ p["w2_t"] + p["b2"][0]
    return h1 + z


if __name__ == "__main__":
    B, N, C = 2, 8, 32
    num_heads = 4
    num_layers = 2
    mlp_ratio = 2.0

    key = jax.random.PRNGKey(0)
    kx, kp = jax.random.split(key)
    x = jax.random.normal(kx, (B, N, C), jnp.float32)

    layer_keys = jax.random.split(kp, num_layers)
    raw_params = [init_layer_params(k, C, mlp_ratio) for k in layer_keys]
    packed_params = [pack_layer_params(p) for p in raw_params]   # prepack once

    out = transformer_forward(x, packed_params, num_heads)
    out = jax.block_until_ready(out)

    # correctness check against the pure-JAX f32 reference (bf16 MXU operands
    # + approx softmax reciprocal in the kernel -> loosened tolerance).
    ref = x
    for p in raw_params:
        ref = _ref_layer(ref, p, num_heads)
    assert jnp.allclose(out, ref, atol=2e-2, rtol=2e-2), "mismatch vs reference"

    print("KERNEL_OK")
</pallas_src>

<mosaic_0001>
module attributes {stable_mosaic.version = 11 : i64} {
  func.func @_copy(%arg0: i32, %arg1: memref<8x128xf32, #tpu.memory_space<vmem>>, %arg2: memref<8x128xf32, #tpu.memory_space<vmem>>) attributes {dimension_semantics = [#tpu.dimension_semantics<arbitrary>], iteration_bounds = array<i64: 1>, scalar_prefetch = 0 : i64, scratch_operands = 0 : i64, tpu.core_type = #tpu.core_type<tc>, window_params = [{pipeline_mode = #tpu.pipeline_mode<synchronous>, transform_indices = @transform_0, window_bounds = array<i64: 8, 128>}, {pipeline_mode = #tpu.pipeline_mode<synchronous>, transform_indices = @transform_1, window_bounds = array<i64: 8, 128>}]} {
    %c0 = arith.constant 0 : index
    %c0_0 = arith.constant 0 : index
    %0 = vector.load %arg1[%c0, %c0_0] : memref<8x128xf32, #tpu.memory_space<vmem>>, vector<8x128xf32>
    %c0_1 = arith.constant 0 : index
    %c0_2 = arith.constant 0 : index
    %1 = vector.load %arg2[%c0_1, %c0_2] : memref<8x128xf32, #tpu.memory_space<vmem>>, vector<8x128xf32>
    tpu.vector_store %arg2[%c0_1, %c0_2], %0 {strides = array<i32>} : memref<8x128xf32, #tpu.memory_space<vmem>>, vector<8x128xf32>,
    return
  }
  func.func @transform_0(%arg0: i32) -> (i32, i32) {
    %c0_i32 = arith.constant 0 : i32
    %c0_i32_0 = arith.constant 0 : i32
    %c0_i32_1 = arith.constant 0 : i32
    return %c0_i32, %c0_i32_0 : i32, i32
  }
  func.func @transform_1(%arg0: i32) -> (i32, i32) {
    %c0_i32 = arith.constant 0 : i32
    %c0_i32_0 = arith.constant 0 : i32
    %c0_i32_1 = arith.constant 0 : i32
    return %c0_i32, %c0_i32_0 : i32, i32
  }
}

module attributes {stable_mosaic.version = 11 : i64} {
  func.func @_transformer_layer_kernel(%arg0: i32, %arg1: memref<2x8x32xf32, #tpu.memory_space<vmem>>, %arg2: memref<1x32xf32, #tpu.memory_space<vmem>>, %arg3: memref<1x32xf32, #tpu.memory_space<vmem>>, %arg4: memref<32x96xbf16, #tpu.memory_space<vmem>>, %arg5: memref<32x32xbf16, #tpu.memory_space<vmem>>, %arg6: memref<1x32xf32, #tpu.memory_space<vmem>>, %arg7: memref<1x32xf32, #tpu.memory_space<vmem>>, %arg8: memref<1x32xf32, #tpu.memory_space<vmem>>, %arg9: memref<32x64xbf16, #tpu.memory_space<vmem>>, %arg10: memref<1x64xf32, #tpu.memory_space<vmem>>, %arg11: memref<64x32xbf16, #tpu.memory_space<vmem>>, %arg12: memref<1x32xf32, #tpu.memory_space<vmem>>, %arg13: memref<2x8x32xf32, #tpu.memory_space<vmem>>, %arg14: memref<16x32xf32, #tpu.memory_space<vmem>>) attributes {dimension_semantics = [#tpu.dimension_semantics<parallel>], iteration_bounds = array<i64: 1>, scalar_prefetch = 0 : i64, scratch_operands = 1 : i64, tpu.core_type = #tpu.core_type<tc>, window_params = [{transform_indices = @transform_0, window_bounds = array<i64: 2, 8, 32>}, {pipeline_mode = #tpu.pipeline_mode<synchronous>, transform_indices = @transform_1, window_bounds = array<i64: 1, 32>}, {pipeline_mode = #tpu.pipeline_mode<synchronous>, transform_indices = @transform_2, window_bounds = array<i64: 1, 32>}, {pipeline_mode = #tpu.pipeline_mode<synchronous>, transform_indices = @transform_3, window_bounds = array<i64: 32, 96>}, {pipeline_mode = #tpu.pipeline_mode<synchronous>, transform_indices = @transform_4, window_bounds = array<i64: 32, 32>}, {pipeline_mode = #tpu.pipeline_mode<synchronous>, transform_indices = @transform_5, window_bounds = array<i64: 1, 32>}, {pipeline_mode = #tpu.pipeline_mode<synchronous>, transform_indices = @transform_6, window_bounds = array<i64: 1, 32>}, {pipeline_mode = #tpu.pipeline_mode<synchronous>, transform_indices = @transform_7, window_bounds = array<i64: 1, 32>}, {pipeline_mode = #tpu.pipeline_mode<synchronous>, transform_indices = @transform_8, window_bounds = array<i64: 32, 64>}, {pipeline_mode = #tpu.pipeline_mode<synchronous>, transform_indices = @transform_9, window_bounds = array<i64: 1, 64>}, {pipeline_mode = #tpu.pipeline_mode<synchronous>, transform_indices = @transform_10, window_bounds = array<i64: 64, 32>}, {pipeline_mode = #tpu.pipeline_mode<synchronous>, transform_indices = @transform_11, window_bounds = array<i64: 1, 32>}, {transform_indices = @transform_12, window_bounds = array<i64: 2, 8, 32>}]} {
    %c0 = arith.constant 0 : index
    %c0_0 = arith.constant 0 : index
    %c0_1 = arith.constant 0 : index
    %0 = vector.load %arg1[%c0, %c0_0, %c0_1] : memref<2x8x32xf32, #tpu.memory_space<vmem>>, vector<2x8x32xf32>
    %1 = vector.shape_cast %0 : vector<2x8x32xf32> to vector<16x32xf32>
    %cst = arith.constant dense<0.000000e+00> : vector<16xf32>
    %2 = vector.multi_reduction <add>, %1, %cst [1] : vector<16x32xf32> to vector<16xf32>
    %3 = vector.shape_cast %2 : vector<16xf32> to vector<16x1xf32>
    %cst_2 = arith.constant 3.200000e+01 : f32
    %4 = vector.broadcast %cst_2 : f32 to vector<16x1xf32>
    %5 = arith.divf %3, %4 : vector<16x1xf32>
    %6 = vector.broadcast %5 : vector<16x1xf32> to vector<16x32xf32>
    %7 = arith.subf %1, %6 : vector<16x32xf32>
    %8 = arith.mulf %7, %7 : vector<16x32xf32>
    %cst_3 = arith.constant dense<0.000000e+00> : vector<16xf32>
    %9 = vector.multi_reduction <add>, %8, %cst_3 [1] : vector<16x32xf32> to vector<16xf32>
    %10 = vector.shape_cast %9 : vector<16xf32> to vector<16x1xf32>
    %cst_4 = arith.constant 3.200000e+01 : f32
    %11 = vector.broadcast %cst_4 : f32 to vector<16x1xf32>
    %12 = arith.divf %10, %11 : vector<16x1xf32>
    %13 = vector.broadcast %5 : vector<16x1xf32> to vector<16x32xf32>
    %14 = arith.subf %1, %13 : vector<16x32xf32>
    %cst_5 = arith.constant 9.99999974E-6 : f32
    %15 = vector.broadcast %cst_5 : f32 to vector<16x1xf32>
    %16 = arith.addf %12, %15 : vector<16x1xf32>
    %17 = math.rsqrt %16 : vector<16x1xf32>
    %18 = vector.broadcast %17 : vector<16x1xf32> to vector<16x32xf32>
    %19 = arith.mulf %14, %18 : vector<16x32xf32>
    %c0_6 = arith.constant 0 : index
    %c0_7 = arith.constant 0 : index
    %20 = vector.load %arg2[%c0_6, %c0_7] : memref<1x32xf32, #tpu.memory_space<vmem>>, vector<1x32xf32>
    %21 = vector.shape_cast %20 : vector<1x32xf32> to vector<32xf32>
    %22 = vector.shape_cast %21 : vector<32xf32> to vector<1x32xf32>
    %23 = vector.broadcast %22 : vector<1x32xf32> to vector<16x32xf32>
    %24 = arith.mulf %19, %23 : vector<16x32xf32>
    %c0_8 = arith.constant 0 : index
    %c0_9 = arith.constant 0 : index
    %25 = vector.load %arg3[%c0_8, %c0_9] : memref<1x32xf32, #tpu.memory_space<vmem>>, vector<1x32xf32>
    %26 = vector.shape_cast %25 : vector<1x32xf32> to vector<32xf32>
    %27 = vector.shape_cast %26 : vector<32xf32> to vector<1x32xf32>
    %28 = vector.broadcast %27 : vector<1x32xf32> to vector<16x32xf32>
    %29 = arith.addf %24, %28 : vector<16x32xf32>
    %30 = arith.truncf %29 : vector<16x32xf32> to vector<16x32xbf16>
    %c0_10 = arith.constant 0 : index
    %c0_11 = arith.constant 0 : index
    %31 = vector.load %arg4[%c0_10, %c0_11] : memref<32x96xbf16, #tpu.memory_space<vmem>>, vector<32x96xbf16>
    %cst_12 = arith.constant dense<0.000000e+00> : vector<16x96xf32>
    %32 = tpu.matmul %30, %31, %cst_12 {dimension_numbers = #tpu.dot_dimension_numbers<[1], [0], [0], [1], [0, 0, 1, 1], [], []>} : vector<16x32xbf16>, vector<32x96xbf16>, vector<16x96xf32> -> vector<16x96xf32>
    %cst_13 = arith.constant 0.000000e+00 : f32
    %33 = vector.broadcast %cst_13 : f32 to vector<16x32xf32>
    %c0_14 = arith.constant 0 : index
    %c0_15 = arith.constant 0 : index
    %34 = vector.load %arg14[%c0_14, %c0_15] : memref<16x32xf32, #tpu.memory_space<vmem>>, vector<16x32xf32>
    tpu.vector_store %arg14[%c0_14, %c0_15], %33 {strides = array<i32>} : memref<16x32xf32, #tpu.memory_space<vmem>>, vector<16x32xf32>,
    %35 = vector.extract_strided_slice %32 {offsets = [0, 0], sizes = [8, 8], strides = [1, 1]} : vector<16x96xf32> to vector<8x8xf32>
    %cst_16 = arith.constant 0.353553385 : f32
    %36 = vector.broadcast %cst_16 : f32 to vector<8x8xf32>
    %37 = arith.mulf %35, %36 : vector<8x8xf32>
    %38 = arith.truncf %37 : vector<8x8xf32> to vector<8x8xbf16>
    %39 = vector.extract_strided_slice %32 {offsets = [0, 32], sizes = [8, 8], strides = [1, 1]} : vector<16x96xf32> to vector<8x8xf32>
    %40 = arith.truncf %39 : vector<8x8xf32> to vector<8x8xbf16>
    %41 = vector.extract_strided_slice %32 {offsets = [0, 64], sizes = [8, 8], strides = [1, 1]} : vector<16x96xf32> to vector<8x8xf32>
    %42 = arith.truncf %41 : vector<8x8xf32> to vector<8x8xbf16>
    %cst_17 = arith.constant dense<0.000000e+00> : vector<8x8xf32>
    %43 = tpu.matmul %38, %40, %cst_17 {dimension_numbers = #tpu.dot_dimension_numbers<[1], [1], [0], [0], [0, 0, 1, 0], [], []>} : vector<8x8xbf16>, vector<8x8xbf16>, vector<8x8xf32> -> vector<8x8xf32>
    %cst_18 = arith.constant dense<0xFF800000> : vector<8xf32>
    %44 = vector.multi_reduction <maximumf>, %43, %cst_18 [1] : vector<8x8xf32> to vector<8xf32>
    %45 = vector.shape_cast %44 : vector<8xf32> to vector<8x1xf32>
    %46 = vector.broadcast %45 : vector<8x1xf32> to vector<8x8xf32>
    %47 = arith.subf %43, %46 : vector<8x8xf32>
    %48 = math.exp %47 : vector<8x8xf32>
    %cst_19 = arith.constant dense<0.000000e+00> : vector<8xf32>
    %49 = vector.multi_reduction <add>, %48, %cst_19 [1] : vector<8x8xf32> to vector<8xf32>
    %50 = vector.shape_cast %49 : vector<8xf32> to vector<8x1xf32>
    %51 = tpu.reciprocal %50 {approx = true} : vector<8x1xf32> -> vector<8x1xf32>
    %52 = vector.broadcast %51 : vector<8x1xf32> to vector<8x8xf32>
    %53 = arith.mulf %48, %52 : vector<8x8xf32>
    %54 = arith.truncf %53 : vector<8x8xf32> to vector<8x8xbf16>
    %cst_20 = arith.constant dense<0.000000e+00> : vector<8x8xf32>
    %55 = tpu.matmul %54, %42, %cst_20 {dimension_numbers = #tpu.dot_dimension_numbers<[1], [0], [0], [1], [0, 0, 1, 1], [], []>} : vector<8x8xbf16>, vector<8x8xbf16>, vector<8x8xf32> -> vector<8x8xf32>
    %c0_21 = arith.constant 0 : index
    %c0_22 = arith.constant 0 : index
    %56 = vector.load %arg14[%c0_21, %c0_22] : memref<16x32xf32, #tpu.memory_space<vmem>>, vector<8x32xf32>
    %57 = arith.truncf %55 : vector<8x8xf32> to vector<8x8xbf16>
    %c0_23 = arith.constant 0 : index
    %c0_24 = arith.constant 0 : index
    %58 = vector.load %arg5[%c0_23, %c0_24] : memref<32x32xbf16, #tpu.memory_space<vmem>>, vector<8x32xbf16>
    %cst_25 = arith.constant dense<0.000000e+00> : vector<8x32xf32>
    %59 = tpu.matmul %57, %58, %cst_25 {dimension_numbers = #tpu.dot_dimension_numbers<[1], [0], [0], [1], [0, 0, 1, 1], [], []>} : vector<8x8xbf16>, vector<8x32xbf16>, vector<8x32xf32> -> vector<8x32xf32>
    %60 = arith.addf %56, %59 : vector<8x32xf32>
    %c0_26 = arith.constant 0 : index
    %c0_27 = arith.constant 0 : index
    %61 = vector.load %arg14[%c0_26, %c0_27] : memref<16x32xf32, #tpu.memory_space<vmem>>, vector<8x32xf32>
    tpu.vector_store %arg14[%c0_26, %c0_27], %60 {strides = array<i32>} : memref<16x32xf32, #tpu.memory_space<vmem>>, vector<8x32xf32>,
    %62 = vector.extract_strided_slice %32 {offsets = [0, 8], sizes = [8, 8], strides = [1, 1]} : vector<16x96xf32> to vector<8x8xf32>
    %cst_28 = arith.constant 0.353553385 : f32
    %63 = vector.broadcast %cst_28 : f32 to vector<8x8xf32>
    %64 = arith.mulf %62, %63 : vector<8x8xf32>
    %65 = arith.truncf %64 : vector<8x8xf32> to vector<8x8xbf16>
    %66 = vector.extract_strided_slice %32 {offsets = [0, 40], sizes = [8, 8], strides = [1, 1]} : vector<16x96xf32> to vector<8x8xf32>
    %67 = arith.truncf %66 : vector<8x8xf32> to vector<8x8xbf16>
    %68 = vector.extract_strided_slice %32 {offsets = [0, 72], sizes = [8, 8], strides = [1, 1]} : vector<16x96xf32> to vector<8x8xf32>
    %69 = arith.truncf %68 : vector<8x8xf32> to vector<8x8xbf16>
    %cst_29 = arith.constant dense<0.000000e+00> : vector<8x8xf32>
    %70 = tpu.matmul %65, %67, %cst_29 {dimension_numbers = #tpu.dot_dimension_numbers<[1], [1], [0], [0], [0, 0, 1, 0], [], []>} : vector<8x8xbf16>, vector<8x8xbf16>, vector<8x8xf32> -> vector<8x8xf32>
    %cst_30 = arith.constant dense<0xFF800000> : vector<8xf32>
    %71 = vector.multi_reduction <maximumf>, %70, %cst_30 [1] : vector<8x8xf32> to vector<8xf32>
    %72 = vector.shape_cast %71 : vector<8xf32> to vector<8x1xf32>
    %73 = vector.broadcast %72 : vector<8x1xf32> to vector<8x8xf32>
    %74 = arith.subf %70, %73 : vector<8x8xf32>
    %75 = math.exp %74 : vector<8x8xf32>
    %cst_31 = arith.constant dense<0.000000e+00> : vector<8xf32>
    %76 = vector.multi_reduction <add>, %75, %cst_31 [1] : vector<8x8xf32> to vector<8xf32>
    %77 = vector.shape_cast %76 : vector<8xf32> to vector<8x1xf32>
    %78 = tpu.reciprocal %77 {approx = true} : vector<8x1xf32> -> vector<8x1xf32>
    %79 = vector.broadcast %78 : vector<8x1xf32> to vector<8x8xf32>
    %80 = arith.mulf %75, %79 : vector<8x8xf32>
    %81 = arith.truncf %80 : vector<8x8xf32> to vector<8x8xbf16>
    %cst_32 = arith.constant dense<0.000000e+00> : vector<8x8xf32>
    %82 = tpu.matmul %81, %69, %cst_32 {dimension_numbers = #tpu.dot_dimension_numbers<[1], [0], [0], [1], [0, 0, 1, 1], [], []>} : vector<8x8xbf16>, vector<8x8xbf16>, vector<8x8xf32> -> vector<8x8xf32>
    %c0_33 = arith.constant 0 : index
    %c0_34 = arith.constant 0 : index
    %83 = vector.load %arg14[%c0_33, %c0_34] : memref<16x32xf32, #tpu.memory_space<vmem>>, vector<8x32xf32>
    %84 = arith.truncf %82 : vector<8x8xf32> to vector<8x8xbf16>
    %c8 = arith.constant 8 : index
    %c0_35 = arith.constant 0 : index
    %85 = vector.load %arg5[%c8, %c0_35] : memref<32x32xbf16, #tpu.memory_space<vmem>>, vector<8x32xbf16>
    %cst_36 = arith.constant dense<0.000000e+00> : vector<8x32xf32>
    %86 = tpu.matmul %84, %85, %cst_36 {dimension_numbers = #tpu.dot_dimension_numbers<[1], [0], [0], [1], [0, 0, 1, 1], [], []>} : vector<8x8xbf16>, vector<8x32xbf16>, vector<8x32xf32> -> vector<8x32xf32>
    %87 = arith.addf %83, %86 : vector<8x32xf32>
    %c0_37 = arith.constant 0 : index
    %c0_38 = arith.constant 0 : index
    %88 = vector.load %arg14[%c0_37, %c0_38] : memref<16x32xf32, #tpu.memory_space<vmem>>, vector<8x32xf32>
    tpu.vector_store %arg14[%c0_37, %c0_38], %87 {strides = array<i32>} : memref<16x32xf32, #tpu.memory_space<vmem>>, vector<8x32xf32>,
    %89 = vector.extract_strided_slice %32 {offsets = [0, 16], sizes = [8, 8], strides = [1, 1]} : vector<16x96xf32> to vector<8x8xf32>
    %cst_39 = arith.constant 0.353553385 : f32
    %90 = vector.broadcast %cst_39 : f32 to vector<8x8xf32>
    %91 = arith.mulf %89, %90 : vector<8x8xf32>
    %92 = arith.truncf %91 : vector<8x8xf32> to vector<8x8xbf16>
    %93 = vector.extract_strided_slice %32 {offsets = [0, 48], sizes = [8, 8], strides = [1, 1]} : vector<16x96xf32> to vector<8x8xf32>
    %94 = arith.truncf %93 : vector<8x8xf32> to vector<8x8xbf16>
    %95 = vector.extract_strided_slice %32 {offsets = [0, 80], sizes = [8, 8], strides = [1, 1]} : vector<16x96xf32> to vector<8x8xf32>
    %96 = arith.truncf %95 : vector<8x8xf32> to vector<8x8xbf16>
    %cst_40 = arith.constant dense<0.000000e+00> : vector<8x8xf32>
    %97 = tpu.matmul %92, %94, %cst_40 {dimension_numbers = #tpu.dot_dimension_numbers<[1], [1], [0], [0], [0, 0, 1, 0], [], []>} : vector<8x8xbf16>, vector<8x8xbf16>, vector<8x8xf32> -> vector<8x8xf32>
    %cst_41 = arith.constant dense<0xFF800000> : vector<8xf32>
    %98 = vector.multi_reduction <maximumf>, %97, %cst_41 [1] : vector<8x8xf32> to vector<8xf32>
    %99 = vector.shape_cast %98 : vector<8xf32> to vector<8x1xf32>
    %100 = vector.broadcast %99 : vector<8x1xf32> to vector<8x8xf32>
    %101 = arith.subf %97, %100 : vector<8x8xf32>
    %102 = math.exp %101 : vector<8x8xf32>
    %cst_42 = arith.constant dense<0.000000e+00> : vector<8xf32>
    %103 = vector.multi_reduction <add>, %102, %cst_42 [1] : vector<8x8xf32> to vector<8xf32>
    %104 = vector.shape_cast %103 : vector<8xf32> to vector<8x1xf32>
    %105 = tpu.reciprocal %104 {approx = true} : vector<8x1xf32> -> vector<8x1xf32>
    %106 = vector.broadcast %105 : vector<8x1xf32> to vector<8x8xf32>
    %107 = arith.mulf %102, %106 : vector<8x8xf32>
    %108 = arith.truncf %107 : vector<8x8xf32> to vector<8x8xbf16>
    %cst_43 = arith.constant dense<0.000000e+00> : vector<8x8xf32>
    %109 = tpu.matmul %108, %96, %cst_43 {dimension_numbers = #tpu.dot_dimension_numbers<[1], [0], [0], [1], [0, 0, 1, 1], [], []>} : vector<8x8xbf16>, vector<8x8xbf16>, vector<8x8xf32> -> vector<8x8xf32>
    %c0_44 = arith.constant 0 : index
    %c0_45 = arith.constant 0 : index
    %110 = vector.load %arg14[%c0_44, %c0_45] : memref<16x32xf32, #tpu.memory_space<vmem>>, vector<8x32xf32>
    %111 = arith.truncf %109 : vector<8x8xf32> to vector<8x8xbf16>
    %c16 = arith.constant 16 : index
    %c0_46 = arith.constant 0 : index
    %112 = vector.load %arg5[%c16, %c0_46] : memref<32x32xbf16, #tpu.memory_space<vmem>>, vector<8x32xbf16>
    %cst_47 = arith.constant dense<0.000000e+00> : vector<8x32xf32>
    %113 = tpu.matmul %111, %112, %cst_47 {dimension_numbers = #tpu.dot_dimension_numbers<[1], [0], [0], [1], [0, 0, 1, 1], [], []>} : vector<8x8xbf16>, vector<8x32xbf16>, vector<8x32xf32> -> vector<8x32xf32>
    %114 = arith.addf %110, %113 : vector<8x32xf32>
    %c0_48 = arith.constant 0 : index
    %c0_49 = arith.constant 0 : index
    %115 = vector.load %arg14[%c0_48, %c0_49] : memref<16x32xf32, #tpu.memory_space<vmem>>, vector<8x32xf32>
    tpu.vector_store %arg14[%c0_48, %c0_49], %114 {strides = array<i32>} : memref<16x32xf32, #tpu.memory_space<vmem>>, vector<8x32xf32>,
    %116 = vector.extract_strided_slice %32 {offsets = [0, 24], sizes = [8, 8], strides = [1, 1]} : vector<16x96xf32> to vector<8x8xf32>
    %cst_50 = arith.constant 0.353553385 : f32
    %117 = vector.broadcast %cst_50 : f32 to vector<8x8xf32>
    %118 = arith.mulf %116, %117 : vector<8x8xf32>
    %119 = arith.truncf %118 : vector<8x8xf32> to vector<8x8xbf16>
    %120 = vector.extract_strided_slice %32 {offsets = [0, 56], sizes = [8, 8], strides = [1, 1]} : vector<16x96xf32> to vector<8x8xf32>
    %121 = arith.truncf %120 : vector<8x8xf32> to vector<8x8xbf16>
    %122 = vector.extract_strided_slice %32 {offsets = [0, 88], sizes = [8, 8], strides = [1, 1]} : vector<16x96xf32> to vector<8x8xf32>
    %123 = arith.truncf %122 : vector<8x8xf32> to vector<8x8xbf16>
    %cst_51 = arith.constant dense<0.000000e+00> : vector<8x8xf32>
    %124 = tpu.matmul %119, %121, %cst_51 {dimension_numbers = #tpu.dot_dimension_numbers<[1], [1], [0], [0], [0, 0, 1, 0], [], []>} : vector<8x8xbf16>, vector<8x8xbf16>, vector<8x8xf32> -> vector<8x8xf32>
    %cst_52 = arith.constant dense<0xFF800000> : vector<8xf32>
    %125 = vector.multi_reduction <maximumf>, %124, %cst_52 [1] : vector<8x8xf32> to vector<8xf32>
    %126 = vector.shape_cast %125 : vector<8xf32> to vector<8x1xf32>
    %127 = vector.broadcast %126 : vector<8x1xf32> to vector<8x8xf32>
    %128 = arith.subf %124, %127 : vector<8x8xf32>
    %129 = math.exp %128 : vector<8x8xf32>
    %cst_53 = arith.constant dense<0.000000e+00> : vector<8xf32>
    %130 = vector.multi_reduction <add>, %129, %cst_53 [1] : vector<8x8xf32> to vector<8xf32>
    %131 = vector.shape_cast %130 : vector<8xf32> to vector<8x1xf32>
    %132 = tpu.reciprocal %131 {approx = true} : vector<8x1xf32> -> vector<8x1xf32>
    %133 = vector.broadcast %132 : vector<8x1xf32> to vector<8x8xf32>
    %134 = arith.mulf %129, %133 : vector<8x8xf32>
    %135 = arith.truncf %134 : vector<8x8xf32> to vector<8x8xbf16>
    %cst_54 = arith.constant dense<0.000000e+00> : vector<8x8xf32>
    %136 = tpu.matmul %135, %123, %cst_54 {dimension_numbers = #tpu.dot_dimension_numbers<[1], [0], [0], [1], [0, 0, 1, 1], [], []>} : vector<8x8xbf16>, vector<8x8xbf16>, vector<8x8xf32> -> vector<8x8xf32>
    %c0_55 = arith.constant 0 : index
    %c0_56 = arith.constant 0 : index
    %137 = vector.load %arg14[%c0_55, %c0_56] : memref<16x32xf32, #tpu.memory_space<vmem>>, vector<8x32xf32>
    %138 = arith.truncf %136 : vector<8x8xf32> to vector<8x8xbf16>
    %c24 = arith.constant 24 : index
    %c0_57 = arith.constant 0 : index
    %139 = vector.load %arg5[%c24, %c0_57] : memref<32x32xbf16, #tpu.memory_space<vmem>>, vector<8x32xbf16>
    %cst_58 = arith.constant dense<0.000000e+00> : vector<8x32xf32>
    %140 = tpu.matmul %138, %139, %cst_58 {dimension_numbers = #tpu.dot_dimension_numbers<[1], [0], [0], [1], [0, 0, 1, 1], [], []>} : vector<8x8xbf16>, vector<8x32xbf16>, vector<8x32xf32> -> vector<8x32xf32>
    %141 = arith.addf %137, %140 : vector<8x32xf32>
    %c0_59 = arith.constant 0 : index
    %c0_60 = arith.constant 0 : index
    %142 = vector.load %arg14[%c0_59, %c0_60] : memref<16x32xf32, #tpu.memory_space<vmem>>, vector<8x32xf32>
    tpu.vector_store %arg14[%c0_59, %c0_60], %141 {strides = array<i32>} : memref<16x32xf32, #tpu.memory_space<vmem>>, vector<8x32xf32>,
    %143 = vector.extract_strided_slice %32 {offsets = [8, 0], sizes = [8, 8], strides = [1, 1]} : vector<16x96xf32> to vector<8x8xf32>
    %cst_61 = arith.constant 0.353553385 : f32
    %144 = vector.broadcast %cst_61 : f32 to vector<8x8xf32>
    %145 = arith.mulf %143, %144 : vector<8x8xf32>
    %146 = arith.truncf %145 : vector<8x8xf32> to vector<8x8xbf16>
    %147 = vector.extract_strided_slice %32 {offsets = [8, 32], sizes = [8, 8], strides = [1, 1]} : vector<16x96xf32> to vector<8x8xf32>
    %148 = arith.truncf %147 : vector<8x8xf32> to vector<8x8xbf16>
    %149 = vector.extract_strided_slice %32 {offsets = [8, 64], sizes = [8, 8], strides = [1, 1]} : vector<16x96xf32> to vector<8x8xf32>
    %150 = arith.truncf %149 : vector<8x8xf32> to vector<8x8xbf16>
    %cst_62 = arith.constant dense<0.000000e+00> : vector<8x8xf32>
    %151 = tpu.matmul %146, %148, %cst_62 {dimension_numbers = #tpu.dot_dimension_numbers<[1], [1], [0], [0], [0, 0, 1, 0], [], []>} : vector<8x8xbf16>, vector<8x8xbf16>, vector<8x8xf32> -> vector<8x8xf32>
    %cst_63 = arith.constant dense<0xFF800000> : vector<8xf32>
    %152 = vector.multi_reduction <maximumf>, %151, %cst_63 [1] : vector<8x8xf32> to vector<8xf32>
    %153 = vector.shape_cast %152 : vector<8xf32> to vector<8x1xf32>
    %154 = vector.broadcast %153 : vector<8x1xf32> to vector<8x8xf32>
    %155 = arith.subf %151, %154 : vector<8x8xf32>
    %156 = math.exp %155 : vector<8x8xf32>
    %cst_64 = arith.constant dense<0.000000e+00> : vector<8xf32>
    %157 = vector.multi_reduction <add>, %156, %cst_64 [1] : vector<8x8xf32> to vector<8xf32>
    %158 = vector.shape_cast %157 : vector<8xf32> to vector<8x1xf32>
    %159 = tpu.reciprocal %158 {approx = true} : vector<8x1xf32> -> vector<8x1xf32>
    %160 = vector.broadcast %159 : vector<8x1xf32> to vector<8x8xf32>
    %161 = arith.mulf %156, %160 : vector<8x8xf32>
    %162 = arith.truncf %161 : vector<8x8xf32> to vector<8x8xbf16>
    %cst_65 = arith.constant dense<0.000000e+00> : vector<8x8xf32>
    %163 = tpu.matmul %162, %150, %cst_65 {dimension_numbers = #tpu.dot_dimension_numbers<[1], [0], [0], [1], [0, 0, 1, 1], [], []>} : vector<8x8xbf16>, vector<8x8xbf16>, vector<8x8xf32> -> vector<8x8xf32>
    %c8_66 = arith.constant 8 : index
    %c0_67 = arith.constant 0 : index
    %164 = vector.load %arg14[%c8_66, %c0_67] : memref<16x32xf32, #tpu.memory_space<vmem>>, vector<8x32xf32>
    %165 = arith.truncf %163 : vector<8x8xf32> to vector<8x8xbf16>
    %c0_68 = arith.constant 0 : index
    %c0_69 = arith.constant 0 : index
    %166 = vector.load %arg5[%c0_68, %c0_69] : memref<32x32xbf16, #tpu.memory_space<vmem>>, vector<8x32xbf16>
    %cst_70 = arith.constant dense<0.000000e+00> : vector<8x32xf32>
    %167 = tpu.matmul %165, %166, %cst_70 {dimension_numbers = #tpu.dot_dimension_numbers<[1], [0], [0], [1], [0, 0, 1, 1], [], []>} : vector<8x8xbf16>, vector<8x32xbf16>, vector<8x32xf32> -> vector<8x32xf32>
    %168 = arith.addf %164, %167 : vector<8x32xf32>
    %c8_71 = arith.constant 8 : index
    %c0_72 = arith.constant 0 : index
    %169 = vector.load %arg14[%c8_71, %c0_72] : memref<16x32xf32, #tpu.memory_space<vmem>>, vector<8x32xf32>
    tpu.vector_store %arg14[%c8_71, %c0_72], %168 {strides = array<i32>} : memref<16x32xf32, #tpu.memory_space<vmem>>, vector<8x32xf32>,
    %170 = vector.extract_strided_slice %32 {offsets = [8, 8], sizes = [8, 8], strides = [1, 1]} : vector<16x96xf32> to vector<8x8xf32>
    %cst_73 = arith.constant 0.353553385 : f32
    %171 = vector.broadcast %cst_73 : f32 to vector<8x8xf32>
    %172 = arith.mulf %170, %171 : vector<8x8xf32>
    %173 = arith.truncf %172 : vector<8x8xf32> to vector<8x8xbf16>
    %174 = vector.extract_strided_slice %32 {offsets = [8, 40], sizes = [8, 8], strides = [1, 1]} : vector<16x96xf32> to vector<8x8xf32>
    %175 = arith.truncf %174 : vector<8x8xf32> to vector<8x8xbf16>
    %176 = vector.extract_strided_slice %32 {offsets = [8, 72], sizes = [8, 8], strides = [1, 1]} : vector<16x96xf32> to vector<8x8xf32>
    %177 = arith.truncf %176 : vector<8x8xf32> to vector<8x8xbf16>
    %cst_74 = arith.constant dense<0.000000e+00> : vector<8x8xf32>
    %178 = tpu.matmul %173, %175, %cst_74 {dimension_numbers = #tpu.dot_dimension_numbers<[1], [1], [0], [0], [0, 0, 1, 0], [], []>} : vector<8x8xbf16>, vector<8x8xbf16>, vector<8x8xf32> -> vector<8x8xf32>
    %cst_75 = arith.constant dense<0xFF800000> : vector<8xf32>
    %179 = vector.multi_reduction <maximumf>, %178, %cst_75 [1] : vector<8x8xf32> to vector<8xf32>
    %180 = vector.shape_cast %179 : vector<8xf32> to vector<8x1xf32>
    %181 = vector.broadcast %180 : vector<8x1xf32> to vector<8x8xf32>
    %182 = arith.subf %178, %181 : vector<8x8xf32>
    %183 = math.exp %182 : vector<8x8xf32>
    %cst_76 = arith.constant dense<0.000000e+00> : vector<8xf32>
    %184 = vector.multi_reduction <add>, %183, %cst_76 [1] : vector<8x8xf32> to vector<8xf32>
    %185 = vector.shape_cast %184 : vector<8xf32> to vector<8x1xf32>
    %186 = tpu.reciprocal %185 {approx = true} : vector<8x1xf32> -> vector<8x1xf32>
    %187 = vector.broadcast %186 : vector<8x1xf32> to vector<8x8xf32>
    %188 = arith.mulf %183, %187 : vector<8x8xf32>
    %189 = arith.truncf %188 : vector<8x8xf32> to vector<8x8xbf16>
    %cst_77 = arith.constant dense<0.000000e+00> : vector<8x8xf32>
    %190 = tpu.matmul %189, %177, %cst_77 {dimension_numbers = #tpu.dot_dimension_numbers<[1], [0], [0], [1], [0, 0, 1, 1], [], []>} : vector<8x8xbf16>, vector<8x8xbf16>, vector<8x8xf32> -> vector<8x8xf32>
    %c8_78 = arith.constant 8 : index
    %c0_79 = arith.constant 0 : index
    %191 = vector.load %arg14[%c8_78, %c0_79] : memref<16x32xf32, #tpu.memory_space<vmem>>, vector<8x32xf32>
    %192 = arith.truncf %190 : vector<8x8xf32> to vector<8x8xbf16>
    %c8_80 = arith.constant 8 : index
    %c0_81 = arith.constant 0 : index
    %193 = vector.load %arg5[%c8_80, %c0_81] : memref<32x32xbf16, #tpu.memory_space<vmem>>, vector<8x32xbf16>
    %cst_82 = arith.constant dense<0.000000e+00> : vector<8x32xf32>
    %194 = tpu.matmul %192, %193, %cst_82 {dimension_numbers = #tpu.dot_dimension_numbers<[1], [0], [0], [1], [0, 0, 1, 1], [], []>} : vector<8x8xbf16>, vector<8x32xbf16>, vector<8x32xf32> -> vector<8x32xf32>
    %195 = arith.addf %191, %194 : vector<8x32xf32>
    %c8_83 = arith.constant 8 : index
    %c0_84 = arith.constant 0 : index
    %196 = vector.load %arg14[%c8_83, %c0_84] : memref<16x32xf32, #tpu.memory_space<vmem>>, vector<8x32xf32>
    tpu.vector_store %arg14[%c8_83, %c0_84], %195 {strides = array<i32>} : memref<16x32xf32, #tpu.memory_space<vmem>>, vector<8x32xf32>,
    %197 = vector.extract_strided_slice %32 {offsets = [8, 16], sizes = [8, 8], strides = [1, 1]} : vector<16x96xf32> to vector<8x8xf32>
    %cst_85 = arith.constant 0.353553385 : f32
    %198 = vector.broadcast %cst_85 : f32 to vector<8x8xf32>
    %199 = arith.mulf %197, %198 : vector<8x8xf32>
    %200 = arith.truncf %199 : vector<8x8xf32> to vector<8x8xbf16>
    %201 = vector.extract_strided_slice %32 {offsets = [8, 48], sizes = [8, 8], strides = [1, 1]} : vector<16x96xf32> to vector<8x8xf32>
    %202 = arith.truncf %201 : vector<8x8xf32> to vector<8x8xbf16>
    %203 = vector.extract_strided_slice %32 {offsets = [8, 80], sizes = [8, 8], strides = [1, 1]} : vector<16x96xf32> to vector<8x8xf32>
    %204 = arith.truncf %203 : vector<8x8xf32> to vector<8x8xbf16>
    %cst_86 = arith.constant dense<0.000000e+00> : vector<8x8xf32>
    %205 = tpu.matmul %200, %202, %cst_86 {dimension_numbers = #tpu.dot_dimension_numbers<[1], [1], [0], [0], [0, 0, 1, 0], [], []>} : vector<8x8xbf16>, vector<8x8xbf16>, vector<8x8xf32> -> vector<8x8xf32>
    %cst_87 = arith.constant dense<0xFF800000> : vector<8xf32>
    %206 = vector.multi_reduction <maximumf>, %205, %cst_87 [1] : vector<8x8xf32> to vector<8xf32>
    %207 = vector.shape_cast %206 : vector<8xf32> to vector<8x1xf32>
    %208 = vector.broadcast %207 : vector<8x1xf32> to vector<8x8xf32>
    %209 = arith.subf %205, %208 : vector<8x8xf32>
    %210 = math.exp %209 : vector<8x8xf32>
    %cst_88 = arith.constant dense<0.000000e+00> : vector<8xf32>
    %211 = vector.multi_reduction <add>, %210, %cst_88 [1] : vector<8x8xf32> to vector<8xf32>
    %212 = vector.shape_cast %211 : vector<8xf32> to vector<8x1xf32>
    %213 = tpu.reciprocal %212 {approx = true} : vector<8x1xf32> -> vector<8x1xf32>
    %214 = vector.broadcast %213 : vector<8x1xf32> to vector<8x8xf32>
    %215 = arith.mulf %210, %214 : vector<8x8xf32>
    %216 = arith.truncf %215 : vector<8x8xf32> to vector<8x8xbf16>
    %cst_89 = arith.constant dense<0.000000e+00> : vector<8x8xf32>
    %217 = tpu.matmul %216, %204, %cst_89 {dimension_numbers = #tpu.dot_dimension_numbers<[1], [0], [0], [1], [0, 0, 1, 1], [], []>} : vector<8x8xbf16>, vector<8x8xbf16>, vector<8x8xf32> -> vector<8x8xf32>
    %c8_90 = arith.constant 8 : index
    %c0_91 = arith.constant 0 : index
    %218 = vector.load %arg14[%c8_90, %c0_91] : memref<16x32xf32, #tpu.memory_space<vmem>>, vector<8x32xf32>
    %219 = arith.truncf %217 : vector<8x8xf32> to vector<8x8xbf16>
    %c16_92 = arith.constant 16 : index
    %c0_93 = arith.constant 0 : index
    %220 = vector.load %arg5[%c16_92, %c0_93] : memref<32x32xbf16, #tpu.memory_space<vmem>>, vector<8x32xbf16>
    %cst_94 = arith.constant dense<0.000000e+00> : vector<8x32xf32>
    %221 = tpu.matmul %219, %220, %cst_94 {dimension_numbers = #tpu.dot_dimension_numbers<[1], [0], [0], [1], [0, 0, 1, 1], [], []>} : vector<8x8xbf16>, vector<8x32xbf16>, vector<8x32xf32> -> vector<8x32xf32>
    %222 = arith.addf %218, %221 : vector<8x32xf32>
    %c8_95 = arith.constant 8 : index
    %c0_96 = arith.constant 0 : index
    %223 = vector.load %arg14[%c8_95, %c0_96] : memref<16x32xf32, #tpu.memory_space<vmem>>, vector<8x32xf32>
    tpu.vector_store %arg14[%c8_95, %c0_96], %222 {strides = array<i32>} : memref<16x32xf32, #tpu.memory_space<vmem>>, vector<8x32xf32>,
    %224 = vector.extract_strided_slice %32 {offsets = [8, 24], sizes = [8, 8], strides = [1, 1]} : vector<16x96xf32> to vector<8x8xf32>
    %cst_97 = arith.constant 0.353553385 : f32
    %225 = vector.broadcast %cst_97 : f32 to vector<8x8xf32>
    %226 = arith.mulf %224, %225 : vector<8x8xf32>
    %227 = arith.truncf %226 : vector<8x8xf32> to vector<8x8xbf16>
    %228 = vector.extract_strided_slice %32 {offsets = [8, 56], sizes = [8, 8], strides = [1, 1]} : vector<16x96xf32> to vector<8x8xf32>
    %229 = arith.truncf %228 : vector<8x8xf32> to vector<8x8xbf16>
    %230 = vector.extract_strided_slice %32 {offsets = [8, 88], sizes = [8, 8], strides = [1, 1]} : vector<16x96xf32> to vector<8x8xf32>
    %231 = arith.truncf %230 : vector<8x8xf32> to vector<8x8xbf16>
    %cst_98 = arith.constant dense<0.000000e+00> : vector<8x8xf32>
    %232 = tpu.matmul %227, %229, %cst_98 {dimension_numbers = #tpu.dot_dimension_numbers<[1], [1], [0], [0], [0, 0, 1, 0], [], []>} : vector<8x8xbf16>, vector<8x8xbf16>, vector<8x8xf32> -> vector<8x8xf32>
    %cst_99 = arith.constant dense<0xFF800000> : vector<8xf32>
    %233 = vector.multi_reduction <maximumf>, %232, %cst_99 [1] : vector<8x8xf32> to vector<8xf32>
    %234 = vector.shape_cast %233 : vector<8xf32> to vector<8x1xf32>
    %235 = vector.broadcast %234 : vector<8x1xf32> to vector<8x8xf32>
    %236 = arith.subf %232, %235 : vector<8x8xf32>
    %237 = math.exp %236 : vector<8x8xf32>
    %cst_100 = arith.constant dense<0.000000e+00> : vector<8xf32>
    %238 = vector.multi_reduction <add>, %237, %cst_100 [1] : vector<8x8xf32> to vector<8xf32>
    %239 = vector.shape_cast %238 : vector<8xf32> to vector<8x1xf32>
    %240 = tpu.reciprocal %239 {approx = true} : vector<8x1xf32> -> vector<8x1xf32>
    %241 = vector.broadcast %240 : vector<8x1xf32> to vector<8x8xf32>
    %242 = arith.mulf %237, %241 : vector<8x8xf32>
    %243 = arith.truncf %242 : vector<8x8xf32> to vector<8x8xbf16>
    %cst_101 = arith.constant dense<0.000000e+00> : vector<8x8xf32>
    %244 = tpu.matmul %243, %231, %cst_101 {dimension_numbers = #tpu.dot_dimension_numbers<[1], [0], [0], [1], [0, 0, 1, 1], [], []>} : vector<8x8xbf16>, vector<8x8xbf16>, vector<8x8xf32> -> vector<8x8xf32>
    %c8_102 = arith.constant 8 : index
    %c0_103 = arith.constant 0 : index
    %245 = vector.load %arg14[%c8_102, %c0_103] : memref<16x32xf32, #tpu.memory_space<vmem>>, vector<8x32xf32>
    %246 = arith.truncf %244 : vector<8x8xf32> to vector<8x8xbf16>
    %c24_104 = arith.constant 24 : index
    %c0_105 = arith.constant 0 : index
    %247 = vector.load %arg5[%c24_104, %c0_105] : memref<32x32xbf16, #tpu.memory_space<vmem>>, vector<8x32xbf16>
    %cst_106 = arith.constant dense<0.000000e+00> : vector<8x32xf32>
    %248 = tpu.matmul %246, %247, %cst_106 {dimension_numbers = #tpu.dot_dimension_numbers<[1], [0], [0], [1], [0, 0, 1, 1], [], []>} : vector<8x8xbf16>, vector<8x32xbf16>, vector<8x32xf32> -> vector<8x32xf32>
    %249 = arith.addf %245, %248 : vector<8x32xf32>
    %c8_107 = arith.constant 8 : index
    %c0_108 = arith.constant 0 : index
    %250 = vector.load %arg14[%c8_107, %c0_108] : memref<16x32xf32, #tpu.memory_space<vmem>>, vector<8x32xf32>
    tpu.vector_store %arg14[%c8_107, %c0_108], %249 {strides = array<i32>} : memref<16x32xf32, #tpu.memory_space<vmem>>, vector<8x32xf32>,
    %c0_109 = arith.constant 0 : index
    %c0_110 = arith.constant 0 : index
    %251 = vector.load %arg14[%c0_109, %c0_110] : memref<16x32xf32, #tpu.memory_space<vmem>>, vector<16x32xf32>
    %252 = arith.addf %1, %251 : vector<16x32xf32>
    %c0_111 = arith.constant 0 : index
    %c0_112 = arith.constant 0 : index
    %253 = vector.load %arg6[%c0_111, %c0_112] : memref<1x32xf32, #tpu.memory_space<vmem>>, vector<1x32xf32>
    %254 = vector.shape_cast %253 : vector<1x32xf32> to vector<32xf32>
    %255 = vector.shape_cast %254 : vector<32xf32> to vector<1x32xf32>
    %256 = vector.broadcast %255 : vector<1x32xf32> to vector<16x32xf32>
    %257 = arith.addf %252, %256 : vector<16x32xf32>
    %cst_113 = arith.constant dense<0.000000e+00> : vector<16xf32>
    %258 = vector.multi_reduction <add>, %257, %cst_113 [1] : vector<16x32xf32> to vector<16xf32>
    %259 = vector.shape_cast %258 : vector<16xf32> to vector<16x1xf32>
    %cst_114 = arith.constant 3.200000e+01 : f32
    %260 = vector.broadcast %cst_114 : f32 to vector<16x1xf32>
    %261 = arith.divf %259, %260 : vector<16x1xf32>
    %262 = vector.broadcast %261 : vector<16x1xf32> to vector<16x32xf32>
    %263 = arith.subf %257, %262 : vector<16x32xf32>
    %264 = arith.mulf %263, %263 : vector<16x32xf32>
    %cst_115 = arith.constant dense<0.000000e+00> : vector<16xf32>
    %265 = vector.multi_reduction <add>, %264, %cst_115 [1] : vector<16x32xf32> to vector<16xf32>
    %266 = vector.shape_cast %265 : vector<16xf32> to vector<16x1xf32>
    %cst_116 = arith.constant 3.200000e+01 : f32
    %267 = vector.broadcast %cst_116 : f32 to vector<16x1xf32>
    %268 = arith.divf %266, %267 : vector<16x1xf32>
    %269 = vector.broadcast %261 : vector<16x1xf32> to vector<16x32xf32>
    %270 = arith.subf %257, %269 : vector<16x32xf32>
    %cst_117 = arith.constant 9.99999974E-6 : f32
    %271 = vector.broadcast %cst_117 : f32 to vector<16x1xf32>
    %272 = arith.addf %268, %271 : vector<16x1xf32>
    %273 = math.rsqrt %272 : vector<16x1xf32>
    %274 = vector.broadcast %273 : vector<16x1xf32> to vector<16x32xf32>
    %275 = arith.mulf %270, %274 : vector<16x32xf32>
    %c0_118 = arith.constant 0 : index
    %c0_119 = arith.constant 0 : index
    %276 = vector.load %arg7[%c0_118, %c0_119] : memref<1x32xf32, #tpu.memory_space<vmem>>, vector<1x32xf32>
    %277 = vector.shape_cast %276 : vector<1x32xf32> to vector<32xf32>
    %278 = vector.shape_cast %277 : vector<32xf32> to vector<1x32xf32>
    %279 = vector.broadcast %278 : vector<1x32xf32> to vector<16x32xf32>
    %280 = arith.mulf %275, %279 : vector<16x32xf32>
    %c0_120 = arith.constant 0 : index
    %c0_121 = arith.constant 0 : index
    %281 = vector.load %arg8[%c0_120, %c0_121] : memref<1x32xf32, #tpu.memory_space<vmem>>, vector<1x32xf32>
    %282 = vector.shape_cast %281 : vector<1x32xf32> to vector<32xf32>
    %283 = vector.shape_cast %282 : vector<32xf32> to vector<1x32xf32>
    %284 = vector.broadcast %283 : vector<1x32xf32> to vector<16x32xf32>
    %285 = arith.addf %280, %284 : vector<16x32xf32>
    %286 = arith.truncf %285 : vector<16x32xf32> to vector<16x32xbf16>
    %c0_122 = arith.constant 0 : index
    %c0_123 = arith.constant 0 : index
    %287 = vector.load %arg9[%c0_122, %c0_123] : memref<32x64xbf16, #tpu.memory_space<vmem>>, vector<32x64xbf16>
    %cst_124 = arith.constant dense<0.000000e+00> : vector<16x64xf32>
    %288 = tpu.matmul %286, %287, %cst_124 {dimension_numbers = #tpu.dot_dimension_numbers<[1], [0], [0], [1], [0, 0, 1, 1], [], []>} : vector<16x32xbf16>, vector<32x64xbf16>, vector<16x64xf32> -> vector<16x64xf32>
    %c0_125 = arith.constant 0 : index
    %c0_126 = arith.constant 0 : index
    %289 = vector.load %arg10[%c0_125, %c0_126] : memref<1x64xf32, #tpu.memory_space<vmem>>, vector<1x64xf32>
    %290 = vector.shape_cast %289 : vector<1x64xf32> to vector<64xf32>
    %291 = vector.shape_cast %290 : vector<64xf32> to vector<1x64xf32>
    %292 = vector.broadcast %291 : vector<1x64xf32> to vector<16x64xf32>
    %293 = arith.addf %288, %292 : vector<16x64xf32>
    %cst_127 = arith.constant 0.000000e+00 : f32
    %294 = vector.broadcast %cst_127 : f32 to vector<16x64xf32>
    %295 = arith.maximumf %293, %294 : vector<16x64xf32>
    %296 = arith.truncf %295 : vector<16x64xf32> to vector<16x64xbf16>
    %c0_128 = arith.constant 0 : index
    %c0_129 = arith.constant 0 : index
    %297 = vector.load %arg11[%c0_128, %c0_129] : memref<64x32xbf16, #tpu.memory_space<vmem>>, vector<64x32xbf16>
    %cst_130 = arith.constant dense<0.000000e+00> : vector<16x32xf32>
    %298 = tpu.matmul %296, %297, %cst_130 {dimension_numbers = #tpu.dot_dimension_numbers<[1], [0], [0], [1], [0, 0, 1, 1], [], []>} : vector<16x64xbf16>, vector<64x32xbf16>, vector<16x32xf32> -> vector<16x32xf32>
    %c0_131 = arith.constant 0 : index
    %c0_132 = arith.constant 0 : index
    %299 = vector.load %arg12[%c0_131, %c0_132] : memref<1x32xf32, #tpu.memory_space<vmem>>, vector<1x32xf32>
    %300 = vector.shape_cast %299 : vector<1x32xf32> to vector<32xf32>
    %301 = vector.shape_cast %300 : vector<32xf32> to vector<1x32xf32>
    %302 = vector.broadcast %301 : vector<1x32xf32> to vector<16x32xf32>
    %303 = arith.addf %298, %302 : vector<16x32xf32>
    %304 = arith.addf %257, %303 : vector<16x32xf32>
    %305 = vector.shape_cast %304 : vector<16x32xf32> to vector<2x8x32xf32>
    %c0_133 = arith.constant 0 : index
    %c0_134 = arith.constant 0 : index
    %c0_135 = arith.constant 0 : index
    %306 = vector.load %arg13[%c0_133, %c0_134, %c0_135] : memref<2x8x32xf32, #tpu.memory_space<vmem>>, vector<2x8x32xf32>
    tpu.vector_store %arg13[%c0_133, %c0_134, %c0_135], %305 {strides = array<i32>} : memref<2x8x32xf32, #tpu.memory_space<vmem>>, vector<2x8x32xf32>,
    return
  }
  func.func @transform_0(%arg0: i32) -> (i32, i32, i32) {
    %c0_i32 = arith.constant 0 : i32
    %c0_i32_0 = arith.constant 0 : i32
    %c0_i32_1 = arith.constant 0 : i32
    return %arg0, %c0_i32, %c0_i32_0 : i32, i32, i32
  }
  func.func @transform_1(%arg0: i32) -> (i32, i32) {
    %c0_i32 = arith.constant 0 : i32
    %c0_i32_0 = arith.constant 0 : i32
    %c0_i32_1 = arith.constant 0 : i32
    return %c0_i32, %c0_i32_0 : i32, i32
  }
  func.func @transform_2(%arg0: i32) -> (i32, i32) {
    %c0_i32 = arith.constant 0 : i32
    %c0_i32_0 = arith.constant 0 : i32
    %c0_i32_1 = arith.constant 0 : i32
    return %c0_i32, %c0_i32_0 : i32, i32
  }
  func.func @transform_3(%arg0: i32) -> (i32, i32) {
    %c0_i32 = arith.constant 0 : i32
    %c0_i32_0 = arith.constant 0 : i32
    %c0_i32_1 = arith.constant 0 : i32
    return %c0_i32, %c0_i32_0 : i32, i32
  }
  func.func @transform_4(%arg0: i32) -> (i32, i32) {
    %c0_i32 = arith.constant 0 : i32
    %c0_i32_0 = arith.constant 0 : i32
    %c0_i32_1 = arith.constant 0 : i32
    return %c0_i32, %c0_i32_0 : i32, i32
  }
  func.func @transform_5(%arg0: i32) -> (i32, i32) {
    %c0_i32 = arith.constant 0 : i32
    %c0_i32_0 = arith.constant 0 : i32
    %c0_i32_1 = arith.constant 0 : i32
    return %c0_i32, %c0_i32_0 : i32, i32
  }
  func.func @transform_6(%arg0: i32) -> (i32, i32) {
    %c0_i32 = arith.constant 0 : i32
    %c0_i32_0 = arith.constant 0 : i32
    %c0_i32_1 = arith.constant 0 : i32
    return %c0_i32, %c0_i32_0 : i32, i32
  }
  func.func @transform_7(%arg0: i32) -> (i32, i32) {
    %c0_i32 = arith.constant 0 : i32
    %c0_i32_0 = arith.constant 0 : i32
    %c0_i32_1 = arith.constant 0 : i32
    return %c0_i32, %c0_i32_0 : i32, i32
  }
  func.func @transform_8(%arg0: i32) -> (i32, i32) {
    %c0_i32 = arith.constant 0 : i32
    %c0_i32_0 = arith.constant 0 : i32
    %c0_i32_1 = arith.constant 0 : i32
    return %c0_i32, %c0_i32_0 : i32, i32
  }
  func.func @transform_9(%arg0: i32) -> (i32, i32) {
    %c0_i32 = arith.constant 0 : i32
    %c0_i32_0 = arith.constant 0 : i32
    %c0_i32_1 = arith.constant 0 : i32
    return %c0_i32, %c0_i32_0 : i32, i32
  }
  func.func @transform_10(%arg0: i32) -> (i32, i32) {
    %c0_i32 = arith.constant 0 : i32
    %c0_i32_0 = arith.constant 0 : i32
    %c0_i32_1 = arith.constant 0 : i32
    return %c0_i32, %c0_i32_0 : i32, i32
  }
  func.func @transform_11(%arg0: i32) -> (i32, i32) {
    %c0_i32 = arith.constant 0 : i32
    %c0_i32_0 = arith.constant 0 : i32
    %c0_i32_1 = arith.constant 0 : i32
    return %c0_i32, %c0_i32_0 : i32, i32
  }
  func.func @transform_12(%arg0: i32) -> (i32, i32, i32) {
    %c0_i32 = arith.constant 0 : i32
    %c0_i32_0 = arith.constant 0 : i32
    %c0_i32_1 = arith.constant 0 : i32
    return %arg0, %c0_i32, %c0_i32_0 : i32, i32, i32
  }
}

</mosaic_0001>

<llo_original>
// kernel: tpu_custom_call.1
$region0: #{tpu_custom_call.1}
  #allocation0 [shape = 'u32[]', space=smem, size = 0x4, offset = 0x4, fixed_abs, tag = 'smem constant byte address 0x4 - core index']
  #allocation1 [shape = 'u32[144,128]{1,0:T(1,128)}', space=vmem, size = 0x12000, scoped, tag = 'internal scratch']
  %s0 = inlined_call_operand.hbm [shape: f32[8,128], index: 0, kind: input, shape index: {}]
  %s1 = inlined_call_operand.hbm [shape: f32[8,128], index: 1, kind: output, shape index: {}]
  %s2 = sld [smem:[#allocation0]]
  $region18: #{tpu_custom_call.1} parent=0
    _
  %s4 = ssub.s32 1, %s2
  %s5 = scalar_select 0, %s4, %s2
  $region1: #{tpu_custom_call.1} parent=0
    #allocation2 [shape = 'u8[4096]{0}', space=vmem, size = 0x1000, scoped, tag = 'input window, operand 0, single buffered']
    #allocation3 [shape = 's32[1]{0}', space=sflag, size = 0x4, scoped, tag = 'scoped memory for tpu_custom_call.1']
    #allocation4 [shape = 's32[1]{0}', space=sflag, size = 0x4, scoped, tag = 'scoped memory for tpu_custom_call.1']
    #allocation5 [shape = 'u8[4096]{0}', space=vmem, size = 0x1000, scoped, tag = 'output window, operand 0, single buffered']
    %6 = vsyncpa [#allocation3], 0
    %7 = vsyncpa [#allocation4], 0
    // Predicated region
    $region2: #{tpu_custom_call.1} parent=1 // pred_check
      _
    $region3: #{tpu_custom_call.1} parent=1 // pred_check_branch
      %9 = sbr.rel (0) target = $region5
    $region4: #{tpu_custom_call.1} parent=1 // pred_region
      %s11 = ssub.s32 128, 128
      %12 = vsyncadd [#allocation3], %s11
      %s14 = sshll.u32 [#allocation2], 4
      %s15 = int_to_ptr.vmem [resolvable:$true] %s14
      %17 = dma.hbm_to_vmem [thread:$0]  %s0, 128, %s15, [#allocation3]
    $region5: #{tpu_custom_call.1} parent=1 // pred_fallthru
      _
    // Predicated region
    $region6: #{tpu_custom_call.1} parent=1 // pred_check
      _
    $region7: #{tpu_custom_call.1} parent=1 // pred_check_branch
      %19 = sbr.rel (0) target = $region9
    $region8: #{tpu_custom_call.1} parent=1 // pred_region
      %20 = dma.done [#allocation3], 128
    $region9: #{tpu_custom_call.1} parent=1 // pred_fallthru
      _
    %v21 = vld [vmem:[#allocation2] sm:$0xff]
    %22 = vst [vmem:[#allocation5] sm:$0xff] %v21
    // Predicated region
    $region10: #{tpu_custom_call.1} parent=1 // pred_check
      _
    $region11: #{tpu_custom_call.1} parent=1 // pred_check_branch
      %24 = sbr.rel (0) target = $region13
    $region12: #{tpu_custom_call.1} parent=1 // pred_region
      %s26 = ssub.s32 128, 128
      %27 = vsyncadd [#allocation4], %s26
      %s29 = sshll.u32 [#allocation5], 4
      %s30 = int_to_ptr.vmem [resolvable:$true] %s29
      %32 = dma.vmem_to_hbm [thread:$0]  %s30, 128, %s1, [#allocation4]
    $region13: #{tpu_custom_call.1} parent=1 // pred_fallthru
      _
    // Predicated region
    $region14: #{tpu_custom_call.1} parent=1 // pred_check
      _
    $region15: #{tpu_custom_call.1} parent=1 // pred_check_branch
      %34 = sbr.rel (0) target = $region17
    $region16: #{tpu_custom_call.1} parent=1 // pred_region
      %35 = dma.done [#allocation4], 128
    $region17: #{tpu_custom_call.1} parent=1 // pred_fallthru
      _
    %36 = vsyncpa [#allocation3], 1
    %37 = vsyncpa [#allocation4], 1

// kernel: tpu_custom_call.1
$region0: #{tpu_custom_call.1}
  #allocation0 [shape = 'u32[]', space=smem, size = 0x4, offset = 0x4, fixed_abs, tag = 'smem constant byte address 0x4 - core index']
  #allocation1 [shape = 'u32[144,128]{1,0:T(1,128)}', space=vmem, size = 0x12000, scoped, tag = 'internal scratch']
  #allocation2 [shape = 'f32[16,32]{1,0:T(8,128)}', space=vmem, size = 0x2000, scoped, tag = 'scratch operand']
  %s0 = inlined_call_operand.hbm [shape: f32[2,8,32], index: 0, kind: input, shape index: {}]
  %s1 = inlined_call_operand.hbm [shape: f32[1,32], index: 1, kind: input, shape index: {}]
  %s2 = inlined_call_operand.hbm [shape: f32[1,32], index: 2, kind: input, shape index: {}]
  %s3 = inlined_call_operand.hbm [shape: bf16[32,96], index: 3, kind: input, shape index: {}]
  %s4 = inlined_call_operand.hbm [shape: bf16[32,32], index: 4, kind: input, shape index: {}]
  %s5 = inlined_call_operand.hbm [shape: f32[1,32], index: 5, kind: input, shape index: {}]
  %s6 = inlined_call_operand.hbm [shape: f32[1,32], index: 6, kind: input, shape index: {}]
  %s7 = inlined_call_operand.hbm [shape: f32[1,32], index: 7, kind: input, shape index: {}]
  %s8 = inlined_call_operand.hbm [shape: bf16[32,64], index: 8, kind: input, shape index: {}]
  %s9 = inlined_call_operand.hbm [shape: f32[1,64], index: 9, kind: input, shape index: {}]
  %s10 = inlined_call_operand.hbm [shape: bf16[64,32], index: 10, kind: input, shape index: {}]
  %s11 = inlined_call_operand.hbm [shape: f32[1,32], index: 11, kind: input, shape index: {}]
  %s12 = inlined_call_operand.hbm [shape: f32[2,8,32], index: 12, kind: output, shape index: {}]
  %s13 = sld [smem:[#allocation0]]
  $region106: #{tpu_custom_call.1} parent=0
    _
  %s15 = ssub.s32 1, %s13
  %s16 = scalar_select 0, %s15, %s13
  $region1: #{tpu_custom_call.1} parent=0
    #allocation3 [shape = 'u8[8192]{0}', space=vmem, size = 0x2000, scoped, tag = 'input window, operand 0, single buffered']
    #allocation4 [shape = 's32[1]{0}', space=sflag, size = 0x4, scoped, tag = 'scoped memory for tpu_custom_call.1']
    #allocation5 [shape = 's32[1]{0}', space=sflag, size = 0x4, scoped, tag = 'scoped memory for tpu_custom_call.1']
    #allocation6 [shape = 'u8[512]{0}', space=vmem, size = 0x400, scoped, tag = 'input window, operand 1, single buffered']
    #allocation7 [shape = 's32[1]{0}', space=sflag, size = 0x4, scoped, tag = 'scoped memory for tpu_custom_call.1']
    #allocation8 [shape = 'u8[512]{0}', space=vmem, size = 0x400, scoped, tag = 'input window, operand 2, single buffered']
    #allocation9 [shape = 'u8[8192]{0}', space=vmem, size = 0x2000, scoped, tag = 'input window, operand 3, single buffered']
    #allocation10 [shape = 's32[1]{0}', space=sflag, size = 0x4, scoped, tag = 'scoped memory for tpu_custom_call.1']
    #allocation11 [shape = 'u8[8192]{0}', space=vmem, size = 0x2000, scoped, tag = 'input window, operand 4, single buffered']
    #allocation12 [shape = 'u8[512]{0}', space=vmem, size = 0x400, scoped, tag = 'input window, operand 5, single buffered']
    #allocation13 [shape = 's32[1]{0}', space=sflag, size = 0x4, scoped, tag = 'scoped memory for tpu_custom_call.1']
    #allocation14 [shape = 'u8[512]{0}', space=vmem, size = 0x400, scoped, tag = 'input window, operand 6, single buffered']
    #allocation15 [shape = 'u8[512]{0}', space=vmem, size = 0x400, scoped, tag = 'input window, operand 7, single buffered']
    #allocation16 [shape = 's32[1]{0}', space=sflag, size = 0x4, scoped, tag = 'scoped memory for tpu_custom_call.1']
    #allocation17 [shape = 'u8[8192]{0}', space=vmem, size = 0x2000, scoped, tag = 'input window, operand 8, single buffered']
    #allocation18 [shape = 'u8[512]{0}', space=vmem, size = 0x400, scoped, tag = 'input window, operand 9, single buffered']
    #allocation19 [shape = 's32[1]{0}', space=sflag, size = 0x4, scoped, tag = 'scoped memory for tpu_custom_call.1']
    #allocation20 [shape = 'u8[16384]{0}', space=vmem, size = 0x4000, scoped, tag = 'input window, operand 10, single buffered']
    #allocation21 [shape = 'u8[512]{0}', space=vmem, size = 0x400, scoped, tag = 'input window, operand 11, single buffered']
    #allocation22 [shape = 's32[1]{0}', space=sflag, size = 0x4, scoped, tag = 'scoped memory for tpu_custom_call.1']
    #allocation23 [shape = 'u8[8192]{0}', space=vmem, size = 0x2000, scoped, tag = 'output window, operand 0, single buffered']
    %17 = vsyncpa [#allocation4], 0
    %18 = vsyncpa [#allocation7], 0
    %19 = vsyncpa [#allocation10], 0
    %20 = vsyncpa [#allocation13], 0
    %21 = vsyncpa [#allocation16], 0
    %22 = vsyncpa [#allocation19], 0
    %23 = vsyncpa [#allocation22], 0
    %24 = vsyncpa [#allocation5], 0
    // Predicated region
    $region2: #{tpu_custom_call.1} parent=1 // pred_check
      _
    $region3: #{tpu_custom_call.1} parent=1 // pred_check_branch
      %26 = sbr.rel (0) target = $region5
    $region4: #{tpu_custom_call.1} parent=1 // pred_region
      %s28 = ssub.s32 256, 256
      %29 = vsyncadd [#allocation4], %s28
      %s30 = sshll.u32 [#allocation3], 4
      %s31 = int_to_ptr.vmem [resolvable:$true] %s30
      %36 = dma.hbm_to_vmem [thread:$0]  %s0, 256, %s31, [#allocation4], 128, 128, 8
    $region5: #{tpu_custom_call.1} parent=1 // pred_fallthru
      _
    // Predicated region
    $region6: #{tpu_custom_call.1} parent=1 // pred_check
      _
    $region7: #{tpu_custom_call.1} parent=1 // pred_check_branch
      %38 = sbr.rel (0) target = $region9
    $region8: #{tpu_custom_call.1} parent=1 // pred_region
      %s40 = ssub.s32 16, 16
      %41 = vsyncadd [#allocation7], %s40
      %s43 = sshll.u32 [#allocation6], 4
      %s44 = int_to_ptr.vmem [resolvable:$true] %s43
      %46 = dma.hbm_to_vmem [thread:$0]  %s1, 16, %s44, [#allocation7]
    $region9: #{tpu_custom_call.1} parent=1 // pred_fallthru
      _
    // Predicated region
    $region10: #{tpu_custom_call.1} parent=1 // pred_check
      _
    $region11: #{tpu_custom_call.1} parent=1 // pred_check_branch
      %48 = sbr.rel (0) target = $region13
    $region12: #{tpu_custom_call.1} parent=1 // pred_region
      %s50 = ssub.s32 16, 16
      %51 = vsyncadd [#allocation7], %s50
      %s53 = sshll.u32 [#allocation8], 4
      %s54 = int_to_ptr.vmem [resolvable:$true] %s53
      %56 = dma.hbm_to_vmem [thread:$0]  %s2, 16, %s54, [#allocation7]
    $region13: #{tpu_custom_call.1} parent=1 // pred_fallthru
      _
    // Predicated region
    $region14: #{tpu_custom_call.1} parent=1 // pred_check
      _
    $region15: #{tpu_custom_call.1} parent=1 // pred_check_branch
      %58 = sbr.rel (0) target = $region17
    $region16: #{tpu_custom_call.1} parent=1 // pred_region
      %s60 = ssub.s32 256, 256
      %61 = vsyncadd [#allocation10], %s60
      %s62 = sshll.u32 [#allocation9], 4
      %s63 = int_to_ptr.vmem [resolvable:$true] %s62
      %68 = dma.hbm_to_vmem [thread:$0]  %s3, 256, %s63, [#allocation10], 64, 64, 4
    $region17: #{tpu_custom_call.1} parent=1 // pred_fallthru
      _
    // Predicated region
    $region18: #{tpu_custom_call.1} parent=1 // pred_check
      _
    $region19: #{tpu_custom_call.1} parent=1 // pred_check_branch
      %70 = sbr.rel (0) target = $region21
    $region20: #{tpu_custom_call.1} parent=1 // pred_region
      %s72 = ssub.s32 256, 256
      %73 = vsyncadd [#allocation10], %s72
      %s74 = sshll.u32 [#allocation11], 4
      %s75 = int_to_ptr.vmem [resolvable:$true] %s74
      %80 = dma.hbm_to_vmem [thread:$0]  %s4, 256, %s75, [#allocation10], 64, 64, 4
    $region21: #{tpu_custom_call.1} parent=1 // pred_fallthru
      _
    // Predicated region
    $region22: #{tpu_custom_call.1} parent=1 // pred_check
      _
    $region23: #{tpu_custom_call.1} parent=1 // pred_check_branch
      %82 = sbr.rel (0) target = $region25
    $region24: #{tpu_custom_call.1} parent=1 // pred_region
      %s84 = ssub.s32 16, 16
      %85 = vsyncadd [#allocation13], %s84
      %s87 = sshll.u32 [#allocation12], 4
      %s88 = int_to_ptr.vmem [resolvable:$true] %s87
      %90 = dma.hbm_to_vmem [thread:$0]  %s5, 16, %s88, [#allocation13]
    $region25: #{tpu_custom_call.1} parent=1 // pred_fallthru
      _
    // Predicated region
    $region26: #{tpu_custom_call.1} parent=1 // pred_check
      _
    $region27: #{tpu_custom_call.1} parent=1 // pred_check_branch
      %92 = sbr.rel (0) target = $region29
    $region28: #{tpu_custom_call.1} parent=1 // pred_region
      %s94 = ssub.s32 16, 16
      %95 = vsyncadd [#allocation13], %s94
      %s97 = sshll.u32 [#allocation14], 4
      %s98 = int_to_ptr.vmem [resolvable:$true] %s97
      %100 = dma.hbm_to_vmem [thread:$0]  %s6, 16, %s98, [#allocation13]
    $region29: #{tpu_custom_call.1} parent=1 // pred_fallthru
      _
    // Predicated region
    $region30: #{tpu_custom_call.1} parent=1 // pred_check
      _
    $region31: #{tpu_custom_call.1} parent=1 // pred_check_branch
      %102 = sbr.rel (0) target = $region33
    $region32: #{tpu_custom_call.1} parent=1 // pred_region
      %s104 = ssub.s32 16, 16
      %105 = vsyncadd [#allocation16], %s104
      %s107 = sshll.u32 [#allocation15], 4
      %s108 = int_to_ptr.vmem [resolvable:$true] %s107
      %110 = dma.hbm_to_vmem [thread:$0]  %s7, 16, %s108, [#allocation16]
    $region33: #{tpu_custom_call.1} parent=1 // pred_fallthru
      _
    // Predicated region
    $region34: #{tpu_custom_call.1} parent=1 // pred_check
      _
    $region35: #{tpu_custom_call.1} parent=1 // pred_check_branch
      %112 = sbr.rel (0) target = $region37
    $region36: #{tpu_custom_call.1} parent=1 // pred_region
      %s114 = ssub.s32 256, 256
      %115 = vsyncadd [#allocation16], %s114
      %s116 = sshll.u32 [#allocation17], 4
      %s117 = int_to_ptr.vmem [resolvable:$true] %s116
      %122 = dma.hbm_to_vmem [thread:$0]  %s8, 256, %s117, [#allocation16], 64, 64, 4
    $region37: #{tpu_custom_call.1} parent=1 // pred_fallthru
      _
    // Predicated region
    $region38: #{tpu_custom_call.1} parent=1 // pred_check
      _
    $region39: #{tpu_custom_call.1} parent=1 // pred_check_branch
      %124 = sbr.rel (0) target = $region41
    $region40: #{tpu_custom_call.1} parent=1 // pred_region
      %s126 = ssub.s32 16, 16
      %127 = vsyncadd [#allocation19], %s126
      %s129 = sshll.u32 [#allocation18], 4
      %s130 = int_to_ptr.vmem [resolvable:$true] %s129
      %132 = dma.hbm_to_vmem [thread:$0]  %s9, 16, %s130, [#allocation19]
    $region41: #{tpu_custom_call.1} parent=1 // pred_fallthru
      _
    // Predicated region
    $region42: #{tpu_custom_call.1} parent=1 // pred_check
      _
    $region43: #{tpu_custom_call.1} parent=1 // pred_check_branch
      %134 = sbr.rel (0) target = $region45
    $region44: #{tpu_custom_call.1} parent=1 // pred_region
      %s136 = ssub.s32 512, 512
      %137 = vsyncadd [#allocation19], %s136
      %s138 = sshll.u32 [#allocation20], 4
      %s139 = int_to_ptr.vmem [resolvable:$true] %s138
      %144 = dma.hbm_to_vmem [thread:$0]  %s10, 512, %s139, [#allocation19], 64, 64, 4
    $region45: #{tpu_custom_call.1} parent=1 // pred_fallthru
      _
    // Predicated region
    $region46: #{tpu_custom_call.1} parent=1 // pred_check
      _
    $region47: #{tpu_custom_call.1} parent=1 // pred_check_branch
      %146 = sbr.rel (0) target = $region49
    $region48: #{tpu_custom_call.1} parent=1 // pred_region
      %s148 = ssub.s32 16, 16
      %149 = vsyncadd [#allocation22], %s148
      %s151 = sshll.u32 [#allocation21], 4
      %s152 = int_to_ptr.vmem [resolvable:$true] %s151
      %154 = dma.hbm_to_vmem [thread:$0]  %s11, 16, %s152, [#allocation22]
    $region49: #{tpu_custom_call.1} parent=1 // pred_fallthru
      _
    // Predicated region
    $region50: #{tpu_custom_call.1} parent=1 // pred_check
      _
    $region51: #{tpu_custom_call.1} parent=1 // pred_check_branch
      %156 = sbr.rel (0) target = $region53
    $region52: #{tpu_custom_call.1} parent=1 // pred_region
      %157 = dma.done [#allocation4], 256
    $region53: #{tpu_custom_call.1} parent=1 // pred_fallthru
      _
    // Predicated region
    $region54: #{tpu_custom_call.1} parent=1 // pred_check
      _
    $region55: #{tpu_custom_call.1} parent=1 // pred_check_branch
      %159 = sbr.rel (0) target = $region57
    $region56: #{tpu_custom_call.1} parent=1 // pred_region
      %160 = dma.done [#allocation7], 16
    $region57: #{tpu_custom_call.1} parent=1 // pred_fallthru
      _
    // Predicated region
    $region58: #{tpu_custom_call.1} parent=1 // pred_check
      _
    $region59: #{tpu_custom_call.1} parent=1 // pred_check_branch
      %162 = sbr.rel (0) target = $region61
    $region60: #{tpu_custom_call.1} parent=1 // pred_region
      %163 = dma.done [#allocation7], 16
    $region61: #{tpu_custom_call.1} parent=1 // pred_fallthru
      _
    // Predicated region
    $region62: #{tpu_custom_call.1} parent=1 // pred_check
      _
    $region63: #{tpu_custom_call.1} parent=1 // pred_check_branch
      %165 = sbr.rel (0) target = $region65
    $region64: #{tpu_custom_call.1} parent=1 // pred_region
      %166 = dma.done [#allocation10], 256
    $region65: #{tpu_custom_call.1} parent=1 // pred_fallthru
      _
    // Predicated region
    $region66: #{tpu_custom_call.1} parent=1 // pred_check
      _
    $region67: #{tpu_custom_call.1} parent=1 // pred_check_branch
      %168 = sbr.rel (0) target = $region69
    $region68: #{tpu_custom_call.1} parent=1 // pred_region
      %169 = dma.done [#allocation10], 256
    $region69: #{tpu_custom_call.1} parent=1 // pred_fallthru
      _
    // Predicated region
    $region70: #{tpu_custom_call.1} parent=1 // pred_check
      _
    $region71: #{tpu_custom_call.1} parent=1 // pred_check_branch
      %171 = sbr.rel (0) target = $region73
    $region72: #{tpu_custom_call.1} parent=1 // pred_region
      %172 = dma.done [#allocation13], 16
    $region73: #{tpu_custom_call.1} parent=1 // pred_fallthru
      _
    // Predicated region
    $region74: #{tpu_custom_call.1} parent=1 // pred_check
      _
    $region75: #{tpu_custom_call.1} parent=1 // pred_check_branch
      %174 = sbr.rel (0) target = $region77
    $region76: #{tpu_custom_call.1} parent=1 // pred_region
      %175 = dma.done [#allocation13], 16
    $region77: #{tpu_custom_call.1} parent=1 // pred_fallthru
      _
    // Predicated region
    $region78: #{tpu_custom_call.1} parent=1 // pred_check
      _
    $region79: #{tpu_custom_call.1} parent=1 // pred_check_branch
      %177 = sbr.rel (0) target = $region81
    $region80: #{tpu_custom_call.1} parent=1 // pred_region
      %178 = dma.done [#allocation16], 16
    $region81: #{tpu_custom_call.1} parent=1 // pred_fallthru
      _
    // Predicated region
    $region82: #{tpu_custom_call.1} parent=1 // pred_check
      _
    $region83: #{tpu_custom_call.1} parent=1 // pred_check_branch
      %180 = sbr.rel (0) target = $region85
    $region84: #{tpu_custom_call.1} parent=1 // pred_region
      %181 = dma.done [#allocation16], 256
    $region85: #{tpu_custom_call.1} parent=1 // pred_fallthru
      _
    // Predicated region
    $region86: #{tpu_custom_call.1} parent=1 // pred_check
      _
    $region87: #{tpu_custom_call.1} parent=1 // pred_check_branch
      %183 = sbr.rel (0) target = $region89
    $region88: #{tpu_custom_call.1} parent=1 // pred_region
      %184 = dma.done [#allocation19], 16
    $region89: #{tpu_custom_call.1} parent=1 // pred_fallthru
      _
    // Predicated region
    $region90: #{tpu_custom_call.1} parent=1 // pred_check
      _
    $region91: #{tpu_custom_call.1} parent=1 // pred_check_branch
      %186 = sbr.rel (0) target = $region93
    $region92: #{tpu_custom_call.1} parent=1 // pred_region
      %187 = dma.done [#allocation19], 512
    $region93: #{tpu_custom_call.1} parent=1 // pred_fallthru
      _
    // Predicated region
    $region94: #{tpu_custom_call.1} parent=1 // pred_check
      _
    $region95: #{tpu_custom_call.1} parent=1 // pred_check_branch
      %189 = sbr.rel (0) target = $region97
    $region96: #{tpu_custom_call.1} parent=1 // pred_region
      %190 = dma.done [#allocation22], 16
    $region97: #{tpu_custom_call.1} parent=1 // pred_fallthru
      _
    %v192 = vld [vmem:[#allocation3] sm:$0xff]
    %v193 = vld [vmem:[#allocation3 + $0x8] sm:$0xff]
    %vm194 = vcmask 261120
    %v195 = vsel %vm194, %v192, 0.0
    %196 = vadd.xlane.f32.xlu0 %v195
    %v197 = vpop.xlane.xlu0 %196
    %v198 = vsel %vm194, %v193, 0.0
    %199 = vadd.xlane.f32.xlu0 %v198
    %v200 = vpop.xlane.xlu0 %199
    %v201 = vrcp.pop 32.0
    %v202 = vmul.f32 %v197, %v201
    %v203 = vmul.f32 %v200, %v201
    %v204 = vsub.f32 %v192, %v202
    %v205 = vsub.f32 %v193, %v203
    %v206 = vmul.f32 %v204, %v204
    %v207 = vmul.f32 %v205, %v205
    %v208 = vsel %vm194, %v206, 0.0
    %209 = vadd.xlane.f32.xlu0 %v208
    %v210 = vpop.xlane.xlu0 %209
    %v211 = vsel %vm194, %v207, 0.0
    %212 = vadd.xlane.f32.xlu0 %v211
    %v213 = vpop.xlane.xlu0 %212
    %v214 = vmul.f32 %v210, %v201
    %v215 = vmul.f32 %v213, %v201
    %v216 = vadd.f32 %v214, 1e-05
    %v217 = vadd.f32 %v215, 1e-05
    %v218 = vrsqrt.pop %v216
    %v219 = vrsqrt.pop %v217
    %v220 = vmul.f32 %v204, %v218
    %v221 = vmul.f32 %v205, %v219
    %v222 = vld [vmem:[#allocation6] sm:$0x1]
    %v224 = vlaneseq
    %v225 = vshrl.u32 %v224, 7
    %v226 = vsub.s32 0, %v225
    %v227 = vrot.slane %v222, %v226
    %v229 = vmul.f32 %v220, %v227
    %v230 = vmul.f32 %v221, %v227
    %v231 = vld [vmem:[#allocation8] sm:$0x1]
    %v233 = vlaneseq
    %v234 = vshrl.u32 %v233, 7
    %v235 = vsub.s32 0, %v234
    %v236 = vrot.slane %v231, %v235
    %v238 = vadd.f32 %v229, %v236
    %v239 = vadd.f32 %v230, %v236
    %v240 = vpack.c.bf16 %v239, %v238
    %v241 = vld [vmem:[#allocation9] sm:$0xf]
    %v242 = vld [vmem:[#allocation9 + $0x4] sm:$0xf]
    %v243 = vld [vmem:[#allocation9 + $0x8] sm:$0xf]
    %v244 = vld [vmem:[#allocation9 + $0xc] sm:$0xf]
    %v249 = vunpack.c.l.b16 %v241
    %v250 = vunpack.c.l.b16 %v242
    %v251 = vunpack.c.l.b16 %v243
    %v252 = vunpack.c.l.b16 %v244
    %v253 = vpack.c.b16 %v250, %v249
    %v254 = vpack.c.b16 %v252, %v251
    %v258 = vsel %vm194, %v240, 0
    %260 = vmatprep.subr.bf16.mxu0 0
    %261 = vmatpush1.bf16.msra.mxu0 %v253
    %262 = vmatprep.subr.bf16.mxu0 0
    %263 = vmatpush1.bf16.msra.mxu0 %v254
    %264 = vmatprep.subr.bf16.mxu0 0
    %265 = vmatpush1.bf16.msra.mxu0 0
    %266 = vmatprep.subr.bf16.mxu0 0
    %267 = vmatpush1.bf16.msra.mxu0 0
    %268 = vmatprep.subr.bf16.mxu0 0
    %269 = vmatpush1.bf16.msra.mxu0 0
    %270 = vmatprep.subr.bf16.mxu0 0
    %271 = vmatpush1.bf16.msra.mxu0 0
    %272 = vmatprep.subr.bf16.mxu0 0
    %273 = vmatpush1.bf16.msra.mxu0 0
    %274 = vmatprep.subr.bf16.mxu0 0
    %275 = vmatpush1.bf16.msra.mxu0 0
    %276 = vmatprep.subr.bf16.mxu0 0
    %277 = vmatpush1.bf16.msra.mxu0 0
    %278 = vmatprep.subr.bf16.mxu0 0
    %279 = vmatpush1.bf16.msra.mxu0 0
    %280 = vmatprep.subr.bf16.mxu0 0
    %281 = vmatpush1.bf16.msra.mxu0 0
    %282 = vmatprep.subr.bf16.mxu0 0
    %283 = vmatpush1.bf16.msra.mxu0 0
    %284 = vmatprep.subr.bf16.mxu0 0
    %285 = vmatpush1.bf16.msra.mxu0 0
    %286 = vmatprep.subr.bf16.mxu0 0
    %287 = vmatpush1.bf16.msra.mxu0 0
    %288 = vmatprep.subr.bf16.mxu0 0
    %289 = vmatpush1.bf16.msra.mxu0 0
    %290 = vmatprep.subr.bf16.mxu0 0
    %291 = vmatpush1.bf16.msra.mxu0 0
    %292 = vmatprep.mubr.bf16.mxu0 0
    %293 = vmatmul.mubr.bf16.gmra.mrb[0].mxu0 %v258
    %v294 = vpop.f32.mrb[0].mxu0
    %v295 = vadd.f32 0.0, %v294
    %v296 = vpop.f32.mrb[0].mxu0
    %v297 = vpop.f32.mrb[0].mxu0
    %v298 = vadd.f32 0.0, %v297
    %v299 = vpop.f32.mrb[0].mxu0
    %300 = vdwg.mxu0
    %301 = vst.msk [vmem:[#allocation2] sm:$0xff] %vm194, 0.0
    %302 = vst.msk [vmem:[#allocation2 + $0x8] sm:$0xff] %vm194, 0.0
    %v303 = vmul.f32 %v295, 0.35355338
    %v304 = vpack.c.bf16 %v303, %v303
    %v305 = vpack.c.bf16 %v295, %v295
    %307 = vrot.lane.b32.xlu0 %v305, 96
    %v308 = vpop.permute.xlu0 %307
    %vm309 = vcmask 64512
    %v311 = vsel %vm309, %v304, 0
    %v314 = vsel %vm309, %v308, 0
    %316 = vmatprep.subr.bf16.mxu0 0
    %317 = vmatpush1.bf16.xpose.msra.mxu0 %v314
    %318 = vmatprep.subr.bf16.mxu0 0
    %319 = vmatpush1.bf16.xpose.msra.mxu0 0
    %320 = vmatprep.subr.bf16.mxu0 0
    %321 = vmatpush1.bf16.xpose.msra.mxu0 0
    %322 = vmatprep.subr.bf16.mxu0 0
    %323 = vmatpush1.bf16.xpose.msra.mxu0 0
    %324 = vmatprep.subr.bf16.mxu0 0
    %325 = vmatpush1.bf16.xpose.msra.mxu0 0
    %326 = vmatprep.subr.bf16.mxu0 0
    %327 = vmatpush1.bf16.xpose.msra.mxu0 0
    %328 = vmatprep.subr.bf16.mxu0 0
    %329 = vmatpush1.bf16.xpose.msra.mxu0 0
    %330 = vmatprep.subr.bf16.mxu0 0
    %331 = vmatpush1.bf16.xpose.msra.mxu0 0
    %332 = vmatprep.subr.bf16.mxu0 0
    %333 = vmatpush1.bf16.xpose.msra.mxu0 0
    %334 = vmatprep.subr.bf16.mxu0 0
    %335 = vmatpush1.bf16.xpose.msra.mxu0 0
    %336 = vmatprep.subr.bf16.mxu0 0
    %337 = vmatpush1.bf16.xpose.msra.mxu0 0
    %338 = vmatprep.subr.bf16.mxu0 0
    %339 = vmatpush1.bf16.xpose.msra.mxu0 0
    %340 = vmatprep.subr.bf16.mxu0 0
    %341 = vmatpush1.bf16.xpose.msra.mxu0 0
    %342 = vmatprep.subr.bf16.mxu0 0
    %343 = vmatpush1.bf16.xpose.msra.mxu0 0
    %344 = vmatprep.subr.bf16.mxu0 0
    %345 = vmatpush1.bf16.xpose.msra.mxu0 0
    %346 = vmatprep.subr.bf16.mxu0 0
    %347 = vmatpush1.bf16.xpose.msra.mxu0 0
    %348 = vmatprep.mubr.bf16.mxu0 0
    %349 = vmatmul.mubr.bf16.gmra.mrb[0].mxu0 %v311
    %v350 = vpop.f32.mrb[0].mxu0
    %v351 = vadd.f32 0.0, %v350
    %v352 = vpop.f32.mrb[0].mxu0
    %v353 = vpop.f32.mrb[0].mxu0
    %v354 = vpop.f32.mrb[0].mxu0
    %355 = vdwg.mxu0
    %v356 = vsel %vm309, %v351, -inf
    %357 = vmax.xlane.f32.xlu0 %v356
    %v358 = vpop.xlane.xlu0 %357
    %v359 = vsub.f32 %v351, %v358
    %v360 = vmul.f32 %v359, 1.442695
    %v361 = vpow.pop %v360
    %v362 = vsel %vm309, %v361, 0.0
    %363 = vadd.xlane.f32.xlu0 %v362
    %v364 = vpop.xlane.xlu0 %363
    %v365 = vrcp.pop %v364
    %v366 = vmul.f32 %v361, %v365
    %v367 = vpack.c.bf16 %v366, %v366
    %368 = vrot.lane.b32.xlu0 %v305, 64
    %v369 = vpop.permute.xlu0 %368
    %v371 = vsel %vm309, %v367, 0
    %vm373 = vcmask 1043456
    %v375 = vsel %vm373, %v369, 0
    %377 = vmatprep.subr.bf16.mxu0 0
    %378 = vmatpush1.bf16.msra.mxu0 %v375
    %379 = vmatprep.subr.bf16.mxu0 0
    %380 = vmatpush1.bf16.msra.mxu0 0
    %381 = vmatprep.subr.bf16.mxu0 0
    %382 = vmatpush1.bf16.msra.mxu0 0
    %383 = vmatprep.subr.bf16.mxu0 0
    %384 = vmatpush1.bf16.msra.mxu0 0
    %385 = vmatprep.subr.bf16.mxu0 0
    %386 = vmatpush1.bf16.msra.mxu0 0
    %387 = vmatprep.subr.bf16.mxu0 0
    %388 = vmatpush1.bf16.msra.mxu0 0
    %389 = vmatprep.subr.bf16.mxu0 0
    %390 = vmatpush1.bf16.msra.mxu0 0
    %391 = vmatprep.subr.bf16.mxu0 0
    %392 = vmatpush1.bf16.msra.mxu0 0
    %393 = vmatprep.subr.bf16.mxu0 0
    %394 = vmatpush1.bf16.msra.mxu0 0
    %395 = vmatprep.subr.bf16.mxu0 0
    %396 = vmatpush1.bf16.msra.mxu0 0
    %397 = vmatprep.subr.bf16.mxu0 0
    %398 = vmatpush1.bf16.msra.mxu0 0
    %399 = vmatprep.subr.bf16.mxu0 0
    %400 = vmatpush1.bf16.msra.mxu0 0
    %401 = vmatprep.subr.bf16.mxu0 0
    %402 = vmatpush1.bf16.msra.mxu0 0
    %403 = vmatprep.subr.bf16.mxu0 0
    %404 = vmatpush1.bf16.msra.mxu0 0
    %405 = vmatprep.subr.bf16.mxu0 0
    %406 = vmatpush1.bf16.msra.mxu0 0
    %407 = vmatprep.subr.bf16.mxu0 0
    %408 = vmatpush1.bf16.msra.mxu0 0
    %409 = vmatprep.mubr.bf16.mxu0 0
    %410 = vmatmul.mubr.bf16.gmra.mrb[0].mxu0 %v371
    %v411 = vpop.f32.mrb[0].mxu0
    %v412 = vadd.f32 0.0, %v411
    %v413 = vpop.f32.mrb[0].mxu0
    %v414 = vpop.f32.mrb[0].mxu0
    %v415 = vpop.f32.mrb[0].mxu0
    %416 = vdwg.mxu0
    %v417 = vld [vmem:[#allocation2] sm:$0xff]
    %v418 = vpack.c.bf16 %v412, %v412
    %v419 = vld [vmem:[#allocation11] sm:$0xf]
    %v421 = vsel %vm309, %v418, 0
    %v424 = vsel %vm373, %v419, 0
    %426 = vmatprep.subr.bf16.mxu0 0
    %427 = vmatpush1.bf16.msra.mxu0 %v424
    %428 = vmatprep.subr.bf16.mxu0 0
    %429 = vmatpush1.bf16.msra.mxu0 0
    %430 = vmatprep.subr.bf16.mxu0 0
    %431 = vmatpush1.bf16.msra.mxu0 0
    %432 = vmatprep.subr.bf16.mxu0 0
    %433 = vmatpush1.bf16.msra.mxu0 0
    %434 = vmatprep.subr.bf16.mxu0 0
    %435 = vmatpush1.bf16.msra.mxu0 0
    %436 = vmatprep.subr.bf16.mxu0 0
    %437 = vmatpush1.bf16.msra.mxu0 0
    %438 = vmatprep.subr.bf16.mxu0 0
    %439 = vmatpush1.bf16.msra.mxu0 0
    %440 = vmatprep.subr.bf16.mxu0 0
    %441 = vmatpush1.bf16.msra.mxu0 0
    %442 = vmatprep.subr.bf16.mxu0 0
    %443 = vmatpush1.bf16.msra.mxu0 0
    %444 = vmatprep.subr.bf16.mxu0 0
    %445 = vmatpush1.bf16.msra.mxu0 0
    %446 = vmatprep.subr.bf16.mxu0 0
    %447 = vmatpush1.bf16.msra.mxu0 0
    %448 = vmatprep.subr.bf16.mxu0 0
    %449 = vmatpush1.bf16.msra.mxu0 0
    %450 = vmatprep.subr.bf16.mxu0 0
    %451 = vmatpush1.bf16.msra.mxu0 0
    %452 = vmatprep.subr.bf16.mxu0 0
    %453 = vmatpush1.bf16.msra.mxu0 0
    %454 = vmatprep.subr.bf16.mxu0 0
    %455 = vmatpush1.bf16.msra.mxu0 0
    %456 = vmatprep.subr.bf16.mxu0 0
    %457 = vmatpush1.bf16.msra.mxu0 0
    %458 = vmatprep.mubr.bf16.mxu0 0
    %459 = vmatmul.mubr.bf16.gmra.mrb[0].mxu0 %v421
    %v460 = vpop.f32.mrb[0].mxu0
    %v461 = vadd.f32 0.0, %v460
    %v462 = vpop.f32.mrb[0].mxu0
    %v463 = vpop.f32.mrb[0].mxu0
    %v464 = vpop.f32.mrb[0].mxu0
    %465 = vdwg.mxu0
    %v466 = vadd.f32 %v417, %v461
    %467 = vst.msk [vmem:[#allocation2] sm:$0xff] %vm194, %v466
    %469 = vrot.lane.b32.xlu0 %v304, 120
    %v470 = vpop.permute.xlu0 %469
    %471 = vrot.lane.b32.xlu0 %v305, 88
    %v472 = vpop.permute.xlu0 %471
    %v474 = vsel %vm309, %v470, 0
    %v477 = vsel %vm309, %v472, 0
    %479 = vmatprep.subr.bf16.mxu0 0
    %480 = vmatpush1.bf16.xpose.msra.mxu0 %v477
    %481 = vmatprep.subr.bf16.mxu0 0
    %482 = vmatpush1.bf16.xpose.msra.mxu0 0
    %483 = vmatprep.subr.bf16.mxu0 0
    %484 = vmatpush1.bf16.xpose.msra.mxu0 0
    %485 = vmatprep.subr.bf16.mxu0 0
    %486 = vmatpush1.bf16.xpose.msra.mxu0 0
    %487 = vmatprep.subr.bf16.mxu0 0
    %488 = vmatpush1.bf16.xpose.msra.mxu0 0
    %489 = vmatprep.subr.bf16.mxu0 0
    %490 = vmatpush1.bf16.xpose.msra.mxu0 0
    %491 = vmatprep.subr.bf16.mxu0 0
    %492 = vmatpush1.bf16.xpose.msra.mxu0 0
    %493 = vmatprep.subr.bf16.mxu0 0
    %494 = vmatpush1.bf16.xpose.msra.mxu0 0
    %495 = vmatprep.subr.bf16.mxu0 0
    %496 = vmatpush1.bf16.xpose.msra.mxu0 0
    %497 = vmatprep.subr.bf16.mxu0 0
    %498 = vmatpush1.bf16.xpose.msra.mxu0 0
    %499 = vmatprep.subr.bf16.mxu0 0
    %500 = vmatpush1.bf16.xpose.msra.mxu0 0
    %501 = vmatprep.subr.bf16.mxu0 0
    %502 = vmatpush1.bf16.xpose.msra.mxu0 0
    %503 = vmatprep.subr.bf16.mxu0 0
    %504 = vmatpush1.bf16.xpose.msra.mxu0 0
    %505 = vmatprep.subr.bf16.mxu0 0
    %506 = vmatpush1.bf16.xpose.msra.mxu0 0
    %507 = vmatprep.subr.bf16.mxu0 0
    %508 = vmatpush1.bf16.xpose.msra.mxu0 0
    %509 = vmatprep.subr.bf16.mxu0 0
    %510 = vmatpush1.bf16.xpose.msra.mxu0 0
    %511 = vmatprep.mubr.bf16.mxu0 0
    %512 = vmatmul.mubr.bf16.gmra.mrb[0].mxu0 %v474
    %v513 = vpop.f32.mrb[0].mxu0
    %v514 = vadd.f32 0.0, %v513
    %v515 = vpop.f32.mrb[0].mxu0
    %v516 = vpop.f32.mrb[0].mxu0
    %v517 = vpop.f32.mrb[0].mxu0
    %518 = vdwg.mxu0
    %v519 = vsel %vm309, %v514, -inf
    %520 = vmax.xlane.f32.xlu0 %v519
    %v521 = vpop.xlane.xlu0 %520
    %v522 = vsub.f32 %v514, %v521
    %v523 = vmul.f32 %v522, 1.442695
    %v524 = vpow.pop %v523
    %v525 = vsel %vm309, %v524, 0.0
    %526 = vadd.xlane.f32.xlu0 %v525
    %v527 = vpop.xlane.xlu0 %526
    %v528 = vrcp.pop %v527
    %v529 = vmul.f32 %v524, %v528
    %v530 = vpack.c.bf16 %v529, %v529
    %531 = vrot.lane.b32.xlu0 %v305, 56
    %v532 = vpop.permute.xlu0 %531
    %v534 = vsel %vm309, %v530, 0
    %v537 = vsel %vm373, %v532, 0
    %539 = vmatprep.subr.bf16.mxu0 0
    %540 = vmatpush1.bf16.msra.mxu0 %v537
    %541 = vmatprep.subr.bf16.mxu0 0
    %542 = vmatpush1.bf16.msra.mxu0 0
    %543 = vmatprep.subr.bf16.mxu0 0
    %544 = vmatpush1.bf16.msra.mxu0 0
    %545 = vmatprep.subr.bf16.mxu0 0
    %546 = vmatpush1.bf16.msra.mxu0 0
    %547 = vmatprep.subr.bf16.mxu0 0
    %548 = vmatpush1.bf16.msra.mxu0 0
    %549 = vmatprep.subr.bf16.mxu0 0
    %550 = vmatpush1.bf16.msra.mxu0 0
    %551 = vmatprep.subr.bf16.mxu0 0
    %552 = vmatpush1.bf16.msra.mxu0 0
    %553 = vmatprep.subr.bf16.mxu0 0
    %554 = vmatpush1.bf16.msra.mxu0 0
    %555 = vmatprep.subr.bf16.mxu0 0
    %556 = vmatpush1.bf16.msra.mxu0 0
    %557 = vmatprep.subr.bf16.mxu0 0
    %558 = vmatpush1.bf16.msra.mxu0 0
    %559 = vmatprep.subr.bf16.mxu0 0
    %560 = vmatpush1.bf16.msra.mxu0 0
    %561 = vmatprep.subr.bf16.mxu0 0
    %562 = vmatpush1.bf16.msra.mxu0 0
    %563 = vmatprep.subr.bf16.mxu0 0
    %564 = vmatpush1.bf16.msra.mxu0 0
    %565 = vmatprep.subr.bf16.mxu0 0
    %566 = vmatpush1.bf16.msra.mxu0 0
    %567 = vmatprep.subr.bf16.mxu0 0
    %568 = vmatpush1.bf16.msra.mxu0 0
    %569 = vmatprep.subr.bf16.mxu0 0
    %570 = vmatpush1.bf16.msra.mxu0 0
    %571 = vmatprep.mubr.bf16.mxu0 0
    %572 = vmatmul.mubr.bf16.gmra.mrb[0].mxu0 %v534
    %v573 = vpop.f32.mrb[0].mxu0
    %v574 = vadd.f32 0.0, %v573
    %v575 = vpop.f32.mrb[0].mxu0
    %v576 = vpop.f32.mrb[0].mxu0
    %v577 = vpop.f32.mrb[0].mxu0
    %578 = vdwg.mxu0
    %v579 = vld [vmem:[#allocation2] sm:$0xff]
    %v580 = vpack.c.bf16 %v574, %v574
    %v581 = vld [vmem:[#allocation11 + $0x4] sm:$0xf]
    %v583 = vsel %vm309, %v580, 0
    %v586 = vsel %vm373, %v581, 0
    %588 = vmatprep.subr.bf16.mxu0 0
    %589 = vmatpush1.bf16.msra.mxu0 %v586
    %590 = vmatprep.subr.bf16.mxu0 0
    %591 = vmatpush1.bf16.msra.mxu0 0
    %592 = vmatprep.subr.bf16.mxu0 0
    %593 = vmatpush1.bf16.msra.mxu0 0
    %594 = vmatprep.subr.bf16.mxu0 0
    %595 = vmatpush1.bf16.msra.mxu0 0
    %596 = vmatprep.subr.bf16.mxu0 0
    %597 = vmatpush1.bf16.msra.mxu0 0
    %598 = vmatprep.subr.bf16.mxu0 0
    %599 = vmatpush1.bf16.msra.mxu0 0
    %600 = vmatprep.subr.bf16.mxu0 0
    %601 = vmatpush1.bf16.msra.mxu0 0
    %602 = vmatprep.subr.bf16.mxu0 0
    %603 = vmatpush1.bf16.msra.mxu0 0
    %604 = vmatprep.subr.bf16.mxu0 0
    %605 = vmatpush1.bf16.msra.mxu0 0
    %606 = vmatprep.subr.bf16.mxu0 0
    %607 = vmatpush1.bf16.msra.mxu0 0
    %608 = vmatprep.subr.bf16.mxu0 0
    %609 = vmatpush1.bf16.msra.mxu0 0
    %610 = vmatprep.subr.bf16.mxu0 0
    %611 = vmatpush1.bf16.msra.mxu0 0
    %612 = vmatprep.subr.bf16.mxu0 0
    %613 = vmatpush1.bf16.msra.mxu0 0
    %614 = vmatprep.subr.bf16.mxu0 0
    %615 = vmatpush1.bf16.msra.mxu0 0
    %616 = vmatprep.subr.bf16.mxu0 0
    %617 = vmatpush1.bf16.msra.mxu0 0
    %618 = vmatprep.subr.bf16.mxu0 0
    %619 = vmatpush1.bf16.msra.mxu0 0
    %620 = vmatprep.mubr.bf16.mxu0 0
    %621 = vmatmul.mubr.bf16.gmra.mrb[0].mxu0 %v583
    %v622 = vpop.f32.mrb[0].mxu0
    %v623 = vadd.f32 0.0, %v622
    %v624 = vpop.f32.mrb[0].mxu0
    %v625 = vpop.f32.mrb[0].mxu0
    %v626 = vpop.f32.mrb[0].mxu0
    %627 = vdwg.mxu0
    %v628 = vadd.f32 %v579, %v623
    %629 = vst.msk [vmem:[#allocation2] sm:$0xff] %vm194, %v628
    %630 = vrot.lane.b32.xlu0 %v304, 112
    %v631 = vpop.permute.xlu0 %630
    %632 = vrot.lane.b32.xlu0 %v305, 80
    %v633 = vpop.permute.xlu0 %632
    %v635 = vsel %vm309, %v631, 0
    %v638 = vsel %vm309, %v633, 0
    %640 = vmatprep.subr.bf16.mxu0 0
    %641 = vmatpush1.bf16.xpose.msra.mxu0 %v638
    %642 = vmatprep.subr.bf16.mxu0 0
    %643 = vmatpush1.bf16.xpose.msra.mxu0 0
    %644 = vmatprep.subr.bf16.mxu0 0
    %645 = vmatpush1.bf16.xpose.msra.mxu0 0
    %646 = vmatprep.subr.bf16.mxu0 0
    %647 = vmatpush1.bf16.xpose.msra.mxu0 0
    %648 = vmatprep.subr.bf16.mxu0 0
    %649 = vmatpush1.bf16.xpose.msra.mxu0 0
    %650 = vmatprep.subr.bf16.mxu0 0
    %651 = vmatpush1.bf16.xpose.msra.mxu0 0
    %652 = vmatprep.subr.bf16.mxu0 0
    %653 = vmatpush1.bf16.xpose.msra.mxu0 0
    %654 = vmatprep.subr.bf16.mxu0 0
    %655 = vmatpush1.bf16.xpose.msra.mxu0 0
    %656 = vmatprep.subr.bf16.mxu0 0
    %657 = vmatpush1.bf16.xpose.msra.mxu0 0
    %658 = vmatprep.subr.bf16.mxu0 0
    %659 = vmatpush1.bf16.xpose.msra.mxu0 0
    %660 = vmatprep.subr.bf16.mxu0 0
    %661 = vmatpush1.bf16.xpose.msra.mxu0 0
    %662 = vmatprep.subr.bf16.mxu0 0
    %663 = vmatpush1.bf16.xpose.msra.mxu0 0
    %664 = vmatprep.subr.bf16.mxu0 0
    %665 = vmatpush1.bf16.xpose.msra.mxu0 0
    %666 = vmatprep.subr.bf16.mxu0 0
    %667 = vmatpush1.bf16.xpose.msra.mxu0 0
    %668 = vmatprep.subr.bf16.mxu0 0
    %669 = vmatpush1.bf16.xpose.msra.mxu0 0
    %670 = vmatprep.subr.bf16.mxu0 0
    %671 = vmatpush1.bf16.xpose.msra.mxu0 0
    %672 = vmatprep.mubr.bf16.mxu0 0
    %673 = vmatmul.mubr.bf16.gmra.mrb[0].mxu0 %v635
    %v674 = vpop.f32.mrb[0].mxu0
    %v675 = vadd.f32 0.0, %v674
    %v676 = vpop.f32.mrb[0].mxu0
    %v677 = vpop.f32.mrb[0].mxu0
    %v678 = vpop.f32.mrb[0].mxu0
    %679 = vdwg.mxu0
    %v680 = vsel %vm309, %v675, -inf
    %681 = vmax.xlane.f32.xlu0 %v680
    %v682 = vpop.xlane.xlu0 %681
    %v683 = vsub.f32 %v675, %v682
    %v684 = vmul.f32 %v683, 1.442695
    %v685 = vpow.pop %v684
    %v686 = vsel %vm309, %v685, 0.0
    %687 = vadd.xlane.f32.xlu0 %v686
    %v688 = vpop.xlane.xlu0 %687
    %v689 = vrcp.pop %v688
    %v690 = vmul.f32 %v685, %v689
    %v691 = vpack.c.bf16 %v690, %v690
    %692 = vrot.lane.b32.xlu0 %v305, 48
    %v693 = vpop.permute.xlu0 %692
    %v695 = vsel %vm309, %v691, 0
    %v698 = vsel %vm373, %v693, 0
    %700 = vmatprep.subr.bf16.mxu0 0
    %701 = vmatpush1.bf16.msra.mxu0 %v698
    %702 = vmatprep.subr.bf16.mxu0 0
    %703 = vmatpush1.bf16.msra.mxu0 0
    %704 = vmatprep.subr.bf16.mxu0 0
    %705 = vmatpush1.bf16.msra.mxu0 0
    %706 = vmatprep.subr.bf16.mxu0 0
    %707 = vmatpush1.bf16.msra.mxu0 0
    %708 = vmatprep.subr.bf16.mxu0 0
    %709 = vmatpush1.bf16.msra.mxu0 0
    %710 = vmatprep.subr.bf16.mxu0 0
    %711 = vmatpush1.bf16.msra.mxu0 0
    %712 = vmatprep.subr.bf16.mxu0 0
    %713 = vmatpush1.bf16.msra.mxu0 0
    %714 = vmatprep.subr.bf16.mxu0 0
    %715 = vmatpush1.bf16.msra.mxu0 0
    %716 = vmatprep.subr.bf16.mxu0 0
    %717 = vmatpush1.bf16.msra.mxu0 0
    %718 = vmatprep.subr.bf16.mxu0 0
    %719 = vmatpush1.bf16.msra.mxu0 0
    %720 = vmatprep.subr.bf16.mxu0 0
    %721 = vmatpush1.bf16.msra.mxu0 0
    %722 = vmatprep.subr.bf16.mxu0 0
    %723 = vmatpush1.bf16.msra.mxu0 0
    %724 = vmatprep.subr.bf16.mxu0 0
    %725 = vmatpush1.bf16.msra.mxu0 0
    %726 = vmatprep.subr.bf16.mxu0 0
    %727 = vmatpush1.bf16.msra.mxu0 0
    %728 = vmatprep.subr.bf16.mxu0 0
    %729 = vmatpush1.bf16.msra.mxu0 0
    %730 = vmatprep.subr.bf16.mxu0 0
    %731 = vmatpush1.bf16.msra.mxu0 0
    %732 = vmatprep.mubr.bf16.mxu0 0
    %733 = vmatmul.mubr.bf16.gmra.mrb[0].mxu0 %v695
    %v734 = vpop.f32.mrb[0].mxu0
    %v735 = vadd.f32 0.0, %v734
    %v736 = vpop.f32.mrb[0].mxu0
    %v737 = vpop.f32.mrb[0].mxu0
    %v738 = vpop.f32.mrb[0].mxu0
    %739 = vdwg.mxu0
    %v740 = vld [vmem:[#allocation2] sm:$0xff]
    %v741 = vpack.c.bf16 %v735, %v735
    %v742 = vld [vmem:[#allocation11 + $0x8] sm:$0xf]
    %v744 = vsel %vm309, %v741, 0
    %v747 = vsel %vm373, %v742, 0
    %749 = vmatprep.subr.bf16.mxu0 0
    %750 = vmatpush1.bf16.msra.mxu0 %v747
    %751 = vmatprep.subr.bf16.mxu0 0
    %752 = vmatpush1.bf16.msra.mxu0 0
    %753 = vmatprep.subr.bf16.mxu0 0
    %754 = vmatpush1.bf16.msra.mxu0 0
    %755 = vmatprep.subr.bf16.mxu0 0
    %756 = vmatpush1.bf16.msra.mxu0 0
    %757 = vmatprep.subr.bf16.mxu0 0
    %758 = vmatpush1.bf16.msra.mxu0 0
    %759 = vmatprep.subr.bf16.mxu0 0
    %760 = vmatpush1.bf16.msra.mxu0 0
    %761 = vmatprep.subr.bf16.mxu0 0
    %762 = vmatpush1.bf16.msra.mxu0 0
    %763 = vmatprep.subr.bf16.mxu0 0
    %764 = vmatpush1.bf16.msra.mxu0 0
    %765 = vmatprep.subr.bf16.mxu0 0
    %766 = vmatpush1.bf16.msra.mxu0 0
    %767 = vmatprep.subr.bf16.mxu0 0
    %768 = vmatpush1.bf16.msra.mxu0 0
    %769 = vmatprep.subr.bf16.mxu0 0
    %770 = vmatpush1.bf16.msra.mxu0 0
    %771 = vmatprep.subr.bf16.mxu0 0
    %772 = vmatpush1.bf16.msra.mxu0 0
    %773 = vmatprep.subr.bf16.mxu0 0
    %774 = vmatpush1.bf16.msra.mxu0 0
    %775 = vmatprep.subr.bf16.mxu0 0
    %776 = vmatpush1.bf16.msra.mxu0 0
    %777 = vmatprep.subr.bf16.mxu0 0
    %778 = vmatpush1.bf16.msra.mxu0 0
    %779 = vmatprep.subr.bf16.mxu0 0
    %780 = vmatpush1.bf16.msra.mxu0 0
    %781 = vmatprep.mubr.bf16.mxu0 0
    %782 = vmatmul.mubr.bf16.gmra.mrb[0].mxu0 %v744
    %v783 = vpop.f32.mrb[0].mxu0
    %v784 = vadd.f32 0.0, %v783
    %v785 = vpop.f32.mrb[0].mxu0
    %v786 = vpop.f32.mrb[0].mxu0
    %v787 = vpop.f32.mrb[0].mxu0
    %788 = vdwg.mxu0
    %v789 = vadd.f32 %v740, %v784
    %790 = vst.msk [vmem:[#allocation2] sm:$0xff] %vm194, %v789
    %791 = vrot.lane.b32.xlu0 %v304, 104
    %v792 = vpop.permute.xlu0 %791
    %793 = vrot.lane.b32.xlu0 %v305, 72
    %v794 = vpop.permute.xlu0 %793
    %v796 = vsel %vm309, %v792, 0
    %v799 = vsel %vm309, %v794, 0
    %801 = vmatprep.subr.bf16.mxu0 0
    %802 = vmatpush1.bf16.xpose.msra.mxu0 %v799
    %803 = vmatprep.subr.bf16.mxu0 0
    %804 = vmatpush1.bf16.xpose.msra.mxu0 0
    %805 = vmatprep.subr.bf16.mxu0 0
    %806 = vmatpush1.bf16.xpose.msra.mxu0 0
    %807 = vmatprep.subr.bf16.mxu0 0
    %808 = vmatpush1.bf16.xpose.msra.mxu0 0
    %809 = vmatprep.subr.bf16.mxu0 0
    %810 = vmatpush1.bf16.xpose.msra.mxu0 0
    %811 = vmatprep.subr.bf16.mxu0 0
    %812 = vmatpush1.bf16.xpose.msra.mxu0 0
    %813 = vmatprep.subr.bf16.mxu0 0
    %814 = vmatpush1.bf16.xpose.msra.mxu0 0
    %815 = vmatprep.subr.bf16.mxu0 0
    %816 = vmatpush1.bf16.xpose.msra.mxu0 0
    %817 = vmatprep.subr.bf16.mxu0 0
    %818 = vmatpush1.bf16.xpose.msra.mxu0 0
    %819 = vmatprep.subr.bf16.mxu0 0
    %820 = vmatpush1.bf16.xpose.msra.mxu0 0
    %821 = vmatprep.subr.bf16.mxu0 0
    %822 = vmatpush1.bf16.xpose.msra.mxu0 0
    %823 = vmatprep.subr.bf16.mxu0 0
    %824 = vmatpush1.bf16.xpose.msra.mxu0 0
    %825 = vmatprep.subr.bf16.mxu0 0
    %826 = vmatpush1.bf16.xpose.msra.mxu0 0
    %827 = vmatprep.subr.bf16.mxu0 0
    %828 = vmatpush1.bf16.xpose.msra.mxu0 0
    %829 = vmatprep.subr.bf16.mxu0 0
    %830 = vmatpush1.bf16.xpose.msra.mxu0 0
    %831 = vmatprep.subr.bf16.mxu0 0
    %832 = vmatpush1.bf16.xpose.msra.mxu0 0
    %833 = vmatprep.mubr.bf16.mxu0 0
    %834 = vmatmul.mubr.bf16.gmra.mrb[0].mxu0 %v796
    %v835 = vpop.f32.mrb[0].mxu0
    %v836 = vadd.f32 0.0, %v835
    %v837 = vpop.f32.mrb[0].mxu0
    %v838 = vpop.f32.mrb[0].mxu0
    %v839 = vpop.f32.mrb[0].mxu0
    %840 = vdwg.mxu0
    %v841 = vsel %vm309, %v836, -inf
    %842 = vmax.xlane.f32.xlu0 %v841
    %v843 = vpop.xlane.xlu0 %842
    %v844 = vsub.f32 %v836, %v843
    %v845 = vmul.f32 %v844, 1.442695
    %v846 = vpow.pop %v845
    %v847 = vsel %vm309, %v846, 0.0
    %848 = vadd.xlane.f32.xlu0 %v847
    %v849 = vpop.xlane.xlu0 %848
    %v850 = vrcp.pop %v849
    %v851 = vmul.f32 %v846, %v850
    %v852 = vpack.c.bf16 %v851, %v851
    %853 = vrot.lane.b32.xlu0 %v305, 40
    %v854 = vpop.permute.xlu0 %853
    %v856 = vsel %vm309, %v852, 0
    %v859 = vsel %vm373, %v854, 0
    %861 = vmatprep.subr.bf16.mxu0 0
    %862 = vmatpush1.bf16.msra.mxu0 %v859
    %863 = vmatprep.subr.bf16.mxu0 0
    %864 = vmatpush1.bf16.msra.mxu0 0
    %865 = vmatprep.subr.bf16.mxu0 0
    %866 = vmatpush1.bf16.msra.mxu0 0
    %867 = vmatprep.subr.bf16.mxu0 0
    %868 = vmatpush1.bf16.msra.mxu0 0
    %869 = vmatprep.subr.bf16.mxu0 0
    %870 = vmatpush1.bf16.msra.mxu0 0
    %871 = vmatprep.subr.bf16.mxu0 0
    %872 = vmatpush1.bf16.msra.mxu0 0
    %873 = vmatprep.subr.bf16.mxu0 0
    %874 = vmatpush1.bf16.msra.mxu0 0
    %875 = vmatprep.subr.bf16.mxu0 0
    %876 = vmatpush1.bf16.msra.mxu0 0
    %877 = vmatprep.subr.bf16.mxu0 0
    %878 = vmatpush1.bf16.msra.mxu0 0
    %879 = vmatprep.subr.bf16.mxu0 0
    %880 = vmatpush1.bf16.msra.mxu0 0
    %881 = vmatprep.subr.bf16.mxu0 0
    %882 = vmatpush1.bf16.msra.mxu0 0
    %883 = vmatprep.subr.bf16.mxu0 0
    %884 = vmatpush1.bf16.msra.mxu0 0
    %885 = vmatprep.subr.bf16.mxu0 0
    %886 = vmatpush1.bf16.msra.mxu0 0
    %887 = vmatprep.subr.bf16.mxu0 0
    %888 = vmatpush1.bf16.msra.mxu0 0
    %889 = vmatprep.subr.bf16.mxu0 0
    %890 = vmatpush1.bf16.msra.mxu0 0
    %891 = vmatprep.subr.bf16.mxu0 0
    %892 = vmatpush1.bf16.msra.mxu0 0
    %893 = vmatprep.mubr.bf16.mxu0 0
    %894 = vmatmul.mubr.bf16.gmra.mrb[0].mxu0 %v856
    %v895 = vpop.f32.mrb[0].mxu0
    %v896 = vadd.f32 0.0, %v895
    %v897 = vpop.f32.mrb[0].mxu0
    %v898 = vpop.f32.mrb[0].mxu0
    %v899 = vpop.f32.mrb[0].mxu0
    %900 = vdwg.mxu0
    %v901 = vld [vmem:[#allocation2] sm:$0xff]
    %v902 = vpack.c.bf16 %v896, %v896
    %v903 = vld [vmem:[#allocation11 + $0xc] sm:$0xf]
    %v905 = vsel %vm309, %v902, 0
    %v908 = vsel %vm373, %v903, 0
    %910 = vmatprep.subr.bf16.mxu0 0
    %911 = vmatpush1.bf16.msra.mxu0 %v908
    %912 = vmatprep.subr.bf16.mxu0 0
    %913 = vmatpush1.bf16.msra.mxu0 0
    %914 = vmatprep.subr.bf16.mxu0 0
    %915 = vmatpush1.bf16.msra.mxu0 0
    %916 = vmatprep.subr.bf16.mxu0 0
    %917 = vmatpush1.bf16.msra.mxu0 0
    %918 = vmatprep.subr.bf16.mxu0 0
    %919 = vmatpush1.bf16.msra.mxu0 0
    %920 = vmatprep.subr.bf16.mxu0 0
    %921 = vmatpush1.bf16.msra.mxu0 0
    %922 = vmatprep.subr.bf16.mxu0 0
    %923 = vmatpush1.bf16.msra.mxu0 0
    %924 = vmatprep.subr.bf16.mxu0 0
    %925 = vmatpush1.bf16.msra.mxu0 0
    %926 = vmatprep.subr.bf16.mxu0 0
    %927 = vmatpush1.bf16.msra.mxu0 0
    %928 = vmatprep.subr.bf16.mxu0 0
    %929 = vmatpush1.bf16.msra.mxu0 0
    %930 = vmatprep.subr.bf16.mxu0 0
    %931 = vmatpush1.bf16.msra.mxu0 0
    %932 = vmatprep.subr.bf16.mxu0 0
    %933 = vmatpush1.bf16.msra.mxu0 0
    %934 = vmatprep.subr.bf16.mxu0 0
    %935 = vmatpush1.bf16.msra.mxu0 0
    %936 = vmatprep.subr.bf16.mxu0 0
    %937 = vmatpush1.bf16.msra.mxu0 0
    %938 = vmatprep.subr.bf16.mxu0 0
    %939 = vmatpush1.bf16.msra.mxu0 0
    %940 = vmatprep.subr.bf16.mxu0 0
    %941 = vmatpush1.bf16.msra.mxu0 0
    %942 = vmatprep.mubr.bf16.mxu0 0
    %943 = vmatmul.mubr.bf16.gmra.mrb[0].mxu0 %v905
    %v944 = vpop.f32.mrb[0].mxu0
    %v945 = vadd.f32 0.0, %v944
    %v946 = vpop.f32.mrb[0].mxu0
    %v947 = vpop.f32.mrb[0].mxu0
    %v948 = vpop.f32.mrb[0].mxu0
    %949 = vdwg.mxu0
    %v950 = vadd.f32 %v901, %v945
    %951 = vst.msk [vmem:[#allocation2] sm:$0xff] %vm194, %v950
    %v952 = vmul.f32 %v298, 0.35355338
    %v953 = vpack.c.bf16 %v952, %v952
    %v954 = vpack.c.bf16 %v298, %v298
    %956 = vrot.lane.b32.xlu0 %v954, 96
    %v957 = vpop.permute.xlu0 %956
    %v959 = vsel %vm309, %v953, 0
    %v962 = vsel %vm309, %v957, 0
    %964 = vmatprep.subr.bf16.mxu0 0
    %965 = vmatpush1.bf16.xpose.msra.mxu0 %v962
    %966 = vmatprep.subr.bf16.mxu0 0
    %967 = vmatpush1.bf16.xpose.msra.mxu0 0
    %968 = vmatprep.subr.bf16.mxu0 0
    %969 = vmatpush1.bf16.xpose.msra.mxu0 0
    %970 = vmatprep.subr.bf16.mxu0 0
    %971 = vmatpush1.bf16.xpose.msra.mxu0 0
    %972 = vmatprep.subr.bf16.mxu0 0
    %973 = vmatpush1.bf16.xpose.msra.mxu0 0
    %974 = vmatprep.subr.bf16.mxu0 0
    %975 = vmatpush1.bf16.xpose.msra.mxu0 0
    %976 = vmatprep.subr.bf16.mxu0 0
    %977 = vmatpush1.bf16.xpose.msra.mxu0 0
    %978 = vmatprep.subr.bf16.mxu0 0
    %979 = vmatpush1.bf16.xpose.msra.mxu0 0
    %980 = vmatprep.subr.bf16.mxu0 0
    %981 = vmatpush1.bf16.xpose.msra.mxu0 0
    %982 = vmatprep.subr.bf16.mxu0 0
    %983 = vmatpush1.bf16.xpose.msra.mxu0 0
    %984 = vmatprep.subr.bf16.mxu0 0
    %985 = vmatpush1.bf16.xpose.msra.mxu0 0
    %986 = vmatprep.subr.bf16.mxu0 0
    %987 = vmatpush1.bf16.xpose.msra.mxu0 0
    %988 = vmatprep.subr.bf16.mxu0 0
    %989 = vmatpush1.bf16.xpose.msra.mxu0 0
    %990 = vmatprep.subr.bf16.mxu0 0
    %991 = vmatpush1.bf16.xpose.msra.mxu0 0
    %992 = vmatprep.subr.bf16.mxu0 0
    %993 = vmatpush1.bf16.xpose.msra.mxu0 0
    %994 = vmatprep.subr.bf16.mxu0 0
    %995 = vmatpush1.bf16.xpose.msra.mxu0 0
    %996 = vmatprep.mubr.bf16.mxu0 0
    %997 = vmatmul.mubr.bf16.gmra.mrb[0].mxu0 %v959
    %v998 = vpop.f32.mrb[0].mxu0
    %v999 = vadd.f32 0.0, %v998
    %v1000 = vpop.f32.mrb[0].mxu0
    %v1001 = vpop.f32.mrb[0].mxu0
    %v1002 = vpop.f32.mrb[0].mxu0
    %1003 = vdwg.mxu0
    %v1004 = vsel %vm309, %v999, -inf
    %1005 = vmax.xlane.f32.xlu0 %v1004
    %v1006 = vpop.xlane.xlu0 %1005
    %v1007 = vsub.f32 %v999, %v1006
    %v1008 = vmul.f32 %v1007, 1.442695
    %v1009 = vpow.pop %v1008
    %v1010 = vsel %vm309, %v1009, 0.0
    %1011 = vadd.xlane.f32.xlu0 %v1010
    %v1012 = vpop.xlane.xlu0 %1011
    %v1013 = vrcp.pop %v1012
    %v1014 = vmul.f32 %v1009, %v1013
    %v1015 = vpack.c.bf16 %v1014, %v1014
    %1016 = vrot.lane.b32.xlu0 %v954, 64
    %v1017 = vpop.permute.xlu0 %1016
    %v1019 = vsel %vm309, %v1015, 0
    %v1022 = vsel %vm373, %v1017, 0
    %1024 = vmatprep.subr.bf16.mxu0 0
    %1025 = vmatpush1.bf16.msra.mxu0 %v1022
    %1026 = vmatprep.subr.bf16.mxu0 0
    %1027 = vmatpush1.bf16.msra.mxu0 0
    %1028 = vmatprep.subr.bf16.mxu0 0
    %1029 = vmatpush1.bf16.msra.mxu0 0
    %1030 = vmatprep.subr.bf16.mxu0 0
    %1031 = vmatpush1.bf16.msra.mxu0 0
    %1032 = vmatprep.subr.bf16.mxu0 0
    %1033 = vmatpush1.bf16.msra.mxu0 0
    %1034 = vmatprep.subr.bf16.mxu0 0
    %1035 = vmatpush1.bf16.msra.mxu0 0
    %1036 = vmatprep.subr.bf16.mxu0 0
    %1037 = vmatpush1.bf16.msra.mxu0 0
    %1038 = vmatprep.subr.bf16.mxu0 0
    %1039 = vmatpush1.bf16.msra.mxu0 0
    %1040 = vmatprep.subr.bf16.mxu0 0
    %1041 = vmatpush1.bf16.msra.mxu0 0
    %1042 = vmatprep.subr.bf16.mxu0 0
    %1043 = vmatpush1.bf16.msra.mxu0 0
    %1044 = vmatprep.subr.bf16.mxu0 0
    %1045 = vmatpush1.bf16.msra.mxu0 0
    %1046 = vmatprep.subr.bf16.mxu0 0
    %1047 = vmatpush1.bf16.msra.mxu0 0
    %1048 = vmatprep.subr.bf16.mxu0 0
    %1049 = vmatpush1.bf16.msra.mxu0 0
    %1050 = vmatprep.subr.bf16.mxu0 0
    %1051 = vmatpush1.bf16.msra.mxu0 0
    %1052 = vmatprep.subr.bf16.mxu0 0
    %1053 = vmatpush1.bf16.msra.mxu0 0
    %1054 = vmatprep.subr.bf16.mxu0 0
    %1055 = vmatpush1.bf16.msra.mxu0 0
    %1056 = vmatprep.mubr.bf16.mxu0 0
    %1057 = vmatmul.mubr.bf16.gmra.mrb[0].mxu0 %v1019
    %v1058 = vpop.f32.mrb[0].mxu0
    %v1059 = vadd.f32 0.0, %v1058
    %v1060 = vpop.f32.mrb[0].mxu0
    %v1061 = vpop.f32.mrb[0].mxu0
    %v1062 = vpop.f32.mrb[0].mxu0
    %1063 = vdwg.mxu0
    %v1064 = vld [vmem:[#allocation2 + $0x8] sm:$0xff]
    %v1065 = vpack.c.bf16 %v1059, %v1059
    %v1066 = vld [vmem:[#allocation11] sm:$0xf]
    %v1068 = vsel %vm309, %v1065, 0
    %v1071 = vsel %vm373, %v1066, 0
    %1073 = vmatprep.subr.bf16.mxu0 0
    %1074 = vmatpush1.bf16.msra.mxu0 %v1071
    %1075 = vmatprep.subr.bf16.mxu0 0
    %1076 = vmatpush1.bf16.msra.mxu0 0
    %1077 = vmatprep.subr.bf16.mxu0 0
    %1078 = vmatpush1.bf16.msra.mxu0 0
    %1079 = vmatprep.subr.bf16.mxu0 0
    %1080 = vmatpush1.bf16.msra.mxu0 0
    %1081 = vmatprep.subr.bf16.mxu0 0
    %1082 = vmatpush1.bf16.msra.mxu0 0
    %1083 = vmatprep.subr.bf16.mxu0 0
    %1084 = vmatpush1.bf16.msra.mxu0 0
    %1085 = vmatprep.subr.bf16.mxu0 0
    %1086 = vmatpush1.bf16.msra.mxu0 0
    %1087 = vmatprep.subr.bf16.mxu0 0
    %1088 = vmatpush1.bf16.msra.mxu0 0
    %1089 = vmatprep.subr.bf16.mxu0 0
    %1090 = vmatpush1.bf16.msra.mxu0 0
    %1091 = vmatprep.subr.bf16.mxu0 0
    %1092 = vmatpush1.bf16.msra.mxu0 0
    %1093 = vmatprep.subr.bf16.mxu0 0
    %1094 = vmatpush1.bf16.msra.mxu0 0
    %1095 = vmatprep.subr.bf16.mxu0 0
    %1096 = vmatpush1.bf16.msra.mxu0 0
    %1097 = vmatprep.subr.bf16.mxu0 0
    %1098 = vmatpush1.bf16.msra.mxu0 0
    %1099 = vmatprep.subr.bf16.mxu0 0
    %1100 = vmatpush1.bf16.msra.mxu0 0
    %1101 = vmatprep.subr.bf16.mxu0 0
    %1102 = vmatpush1.bf16.msra.mxu0 0
    %1103 = vmatprep.subr.bf16.mxu0 0
    %1104 = vmatpush1.bf16.msra.mxu0 0
    %1105 = vmatprep.mubr.bf16.mxu0 0
    %1106 = vmatmul.mubr.bf16.gmra.mrb[0].mxu0 %v1068
    %v1107 = vpop.f32.mrb[0].mxu0
    %v1108 = vadd.f32 0.0, %v1107
    %v1109 = vpop.f32.mrb[0].mxu0
    %v1110 = vpop.f32.mrb[0].mxu0
    %v1111 = vpop.f32.mrb[0].mxu0
    %1112 = vdwg.mxu0
    %v1113 = vadd.f32 %v1064, %v1108
    %1114 = vst.msk [vmem:[#allocation2 + $0x8] sm:$0xff] %vm194, %v1113
    %1116 = vrot.lane.b32.xlu0 %v953, 120
    %v1117 = vpop.permute.xlu0 %1116
    %1118 = vrot.lane.b32.xlu0 %v954, 88
    %v1119 = vpop.permute.xlu0 %1118
    %v1121 = vsel %vm309, %v1117, 0
    %v1124 = vsel %vm309, %v1119, 0
    %1126 = vmatprep.subr.bf16.mxu0 0
    %1127 = vmatpush1.bf16.xpose.msra.mxu0 %v1124
    %1128 = vmatprep.subr.bf16.mxu0 0
    %1129 = vmatpush1.bf16.xpose.msra.mxu0 0
    %1130 = vmatprep.subr.bf16.mxu0 0
    %1131 = vmatpush1.bf16.xpose.msra.mxu0 0
    %1132 = vmatprep.subr.bf16.mxu0 0
    %1133 = vmatpush1.bf16.xpose.msra.mxu0 0
    %1134 = vmatprep.subr.bf16.mxu0 0
    %1135 = vmatpush1.bf16.xpose.msra.mxu0 0
    %1136 = vmatprep.subr.bf16.mxu0 0
    %1137 = vmatpush1.bf16.xpose.msra.mxu0 0
    %1138 = vmatprep.subr.bf16.mxu0 0
    %1139 = vmatpush1.bf16.xpose.msra.mxu0 0
    %1140 = vmatprep.subr.bf16.mxu0 0
    %1141 = vmatpush1.bf16.xpose.msra.mxu0 0
    %1142 = vmatprep.subr.bf16.mxu0 0
    %1143 = vmatpush1.bf16.xpose.msra.mxu0 0
    %1144 = vmatprep.subr.bf16.mxu0 0
    %1145 = vmatpush1.bf16.xpose.msra.mxu0 0
    %1146 = vmatprep.subr.bf16.mxu0 0
    %1147 = vmatpush1.bf16.xpose.msra.mxu0 0
    %1148 = vmatprep.subr.bf16.mxu0 0
    %1149 = vmatpush1.bf16.xpose.msra.mxu0 0
    %1150 = vmatprep.subr.bf16.mxu0 0
    %1151 = vmatpush1.bf16.xpose.msra.mxu0 0
    %1152 = vmatprep.subr.bf16.mxu0 0
    %1153 = vmatpush1.bf16.xpose.msra.mxu0 0
    %1154 = vmatprep.subr.bf16.mxu0 0
    %1155 = vmatpush1.bf16.xpose.msra.mxu0 0
    %1156 = vmatprep.subr.bf16.mxu0 0
    %1157 = vmatpush1.bf16.xpose.msra.mxu0 0
    %1158 = vmatprep.mubr.bf16.mxu0 0
    %1159 = vmatmul.mubr.bf16.gmra.mrb[0].mxu0 %v1121
    %v1160 = vpop.f32.mrb[0].mxu0
    %v1161 = vadd.f32 0.0, %v1160
    %v1162 = vpop.f32.mrb[0].mxu0
    %v1163 = vpop.f32.mrb[0].mxu0
    %v1164 = vpop.f32.mrb[0].mxu0
    %1165 = vdwg.mxu0
    %v1166 = vsel %vm309, %v1161, -inf
    %1167 = vmax.xlane.f32.xlu0 %v1166
    %v1168 = vpop.xlane.xlu0 %1167
    %v1169 = vsub.f32 %v1161, %v1168
    %v1170 = vmul.f32 %v1169, 1.442695
    %v1171 = vpow.pop %v1170
    %v1172 = vsel %vm309, %v1171, 0.0
    %1173 = vadd.xlane.f32.xlu0 %v1172
    %v1174 = vpop.xlane.xlu0 %1173
    %v1175 = vrcp.pop %v1174
    %v1176 = vmul.f32 %v1171, %v1175
    %v1177 = vpack.c.bf16 %v1176, %v1176
    %1178 = vrot.lane.b32.xlu0 %v954, 56
    %v1179 = vpop.permute.xlu0 %1178
    %v1181 = vsel %vm309, %v1177, 0
    %v1184 = vsel %vm373, %v1179, 0
    %1186 = vmatprep.subr.bf16.mxu0 0
    %1187 = vmatpush1.bf16.msra.mxu0 %v1184
    %1188 = vmatprep.subr.bf16.mxu0 0
    %1189 = vmatpush1.bf16.msra.mxu0 0
    %1190 = vmatprep.subr.bf16.mxu0 0
    %1191 = vmatpush1.bf16.msra.mxu0 0
    %1192 = vmatprep.subr.bf16.mxu0 0
    %1193 = vmatpush1.bf16.msra.mxu0 0
    %1194 = vmatprep.subr.bf16.mxu0 0
    %1195 = vmatpush1.bf16.msra.mxu0 0
    %1196 = vmatprep.subr.bf16.mxu0 0
    %1197 = vmatpush1.bf16.msra.mxu0 0
    %1198 = vmatprep.subr.bf16.mxu0 0
    %1199 = vmatpush1.bf16.msra.mxu0 0
    %1200 = vmatprep.subr.bf16.mxu0 0
    %1201 = vmatpush1.bf16.msra.mxu0 0
    %1202 = vmatprep.subr.bf16.mxu0 0
    %1203 = vmatpush1.bf16.msra.mxu0 0
    %1204 = vmatprep.subr.bf16.mxu0 0
    %1205 = vmatpush1.bf16.msra.mxu0 0
    %1206 = vmatprep.subr.bf16.mxu0 0
    %1207 = vmatpush1.bf16.msra.mxu0 0
    %1208 = vmatprep.subr.bf16.mxu0 0
    %1209 = vmatpush1.bf16.msra.mxu0 0
    %1210 = vmatprep.subr.bf16.mxu0 0
    %1211 = vmatpush1.bf16.msra.mxu0 0
    %1212 = vmatprep.subr.bf16.mxu0 0
    %1213 = vmatpush1.bf16.msra.mxu0 0
    %1214 = vmatprep.subr.bf16.mxu0 0
    %1215 = vmatpush1.bf16.msra.mxu0 0
    %1216 = vmatprep.subr.bf16.mxu0 0
    %1217 = vmatpush1.bf16.msra.mxu0 0
    %1218 = vmatprep.mubr.bf16.mxu0 0
    %1219 = vmatmul.mubr.bf16.gmra.mrb[0].mxu0 %v1181
    %v1220 = vpop.f32.mrb[0].mxu0
    %v1221 = vadd.f32 0.0, %v1220
    %v1222 = vpop.f32.mrb[0].mxu0
    %v1223 = vpop.f32.mrb[0].mxu0
    %v1224 = vpop.f32.mrb[0].mxu0
    %1225 = vdwg.mxu0
    %v1226 = vld [vmem:[#allocation2 + $0x8] sm:$0xff]
    %v1227 = vpack.c.bf16 %v1221, %v1221
    %v1228 = vld [vmem:[#allocation11 + $0x4] sm:$0xf]
    %v1230 = vsel %vm309, %v1227, 0
    %v1233 = vsel %vm373, %v1228, 0
    %1235 = vmatprep.subr.bf16.mxu0 0
    %1236 = vmatpush1.bf16.msra.mxu0 %v1233
    %1237 = vmatprep.subr.bf16.mxu0 0
    %1238 = vmatpush1.bf16.msra.mxu0 0
    %1239 = vmatprep.subr.bf16.mxu0 0
    %1240 = vmatpush1.bf16.msra.mxu0 0
    %1241 = vmatprep.subr.bf16.mxu0 0
    %1242 = vmatpush1.bf16.msra.mxu0 0
    %1243 = vmatprep.subr.bf16.mxu0 0
    %1244 = vmatpush1.bf16.msra.mxu0 0
    %1245 = vmatprep.subr.bf16.mxu0 0
    %1246 = vmatpush1.bf16.msra.mxu0 0
    %1247 = vmatprep.subr.bf16.mxu0 0
    %1248 = vmatpush1.bf16.msra.mxu0 0
    %1249 = vmatprep.subr.bf16.mxu0 0
    %1250 = vmatpush1.bf16.msra.mxu0 0
    %1251 = vmatprep.subr.bf16.mxu0 0
    %1252 = vmatpush1.bf16.msra.mxu0 0
    %1253 = vmatprep.subr.bf16.mxu0 0
    %1254 = vmatpush1.bf16.msra.mxu0 0
    %1255 = vmatprep.subr.bf16.mxu0 0
    %1256 = vmatpush1.bf16.msra.mxu0 0
    %1257 = vmatprep.subr.bf16.mxu0 0
    %1258 = vmatpush1.bf16.msra.mxu0 0
    %1259 = vmatprep.subr.bf16.mxu0 0
    %1260 = vmatpush1.bf16.msra.mxu0 0
    %1261 = vmatprep.subr.bf16.mxu0 0
    %1262 = vmatpush1.bf16.msra.mxu0 0
    %1263 = vmatprep.subr.bf16.mxu0 0
    %1264 = vmatpush1.bf16.msra.mxu0 0
    %1265 = vmatprep.subr.bf16.mxu0 0
    %1266 = vmatpush1.bf16.msra.mxu0 0
    %1267 = vmatprep.mubr.bf16.mxu0 0
    %1268 = vmatmul.mubr.bf16.gmra.mrb[0].mxu0 %v1230
    %v1269 = vpop.f32.mrb[0].mxu0
    %v1270 = vadd.f32 0.0, %v1269
    %v1271 = vpop.f32.mrb[0].mxu0
    %v1272 = vpop.f32.mrb[0].mxu0
    %v1273 = vpop.f32.mrb[0].mxu0
    %1274 = vdwg.mxu0
    %v1275 = vadd.f32 %v1226, %v1270
    %1276 = vst.msk [vmem:[#allocation2 + $0x8] sm:$0xff] %vm194, %v1275
    %1277 = vrot.lane.b32.xlu0 %v953, 112
    %v1278 = vpop.permute.xlu0 %1277
    %1279 = vrot.lane.b32.xlu0 %v954, 80
    %v1280 = vpop.permute.xlu0 %1279
    %v1282 = vsel %vm309, %v1278, 0
    %v1285 = vsel %vm309, %v1280, 0
    %1287 = vmatprep.subr.bf16.mxu0 0
    %1288 = vmatpush1.bf16.xpose.msra.mxu0 %v1285
    %1289 = vmatprep.subr.bf16.mxu0 0
    %1290 = vmatpush1.bf16.xpose.msra.mxu0 0
    %1291 = vmatprep.subr.bf16.mxu0 0
    %1292 = vmatpush1.bf16.xpose.msra.mxu0 0
    %1293 = vmatprep.subr.bf16.mxu0 0
    %1294 = vmatpush1.bf16.xpose.msra.mxu0 0
    %1295 = vmatprep.subr.bf16.mxu0 0
    %1296 = vmatpush1.bf16.xpose.msra.mxu0 0
    %1297 = vmatprep.subr.bf16.mxu0 0
    %1298 = vmatpush1.bf16.xpose.msra.mxu0 0
    %1299 = vmatprep.subr.bf16.mxu0 0
    %1300 = vmatpush1.bf16.xpose.msra.mxu0 0
    %1301 = vmatprep.subr.bf16.mxu0 0
    %1302 = vmatpush1.bf16.xpose.msra.mxu0 0
    %1303 = vmatprep.subr.bf16.mxu0 0
    %1304 = vmatpush1.bf16.xpose.msra.mxu0 0
    %1305 = vmatprep.subr.bf16.mxu0 0
    %1306 = vmatpush1.bf16.xpose.msra.mxu0 0
    %1307 = vmatprep.subr.bf16.mxu0 0
    %1308 = vmatpush1.bf16.xpose.msra.mxu0 0
    %1309 = vmatprep.subr.bf16.mxu0 0
    %1310 = vmatpush1.bf16.xpose.msra.mxu0 0
    %1311 = vmatprep.subr.bf16.mxu0 0
    %1312 = vmatpush1.bf16.xpose.msra.mxu0 0
    %1313 = vmatprep.subr.bf16.mxu0 0
    %1314 = vmatpush1.bf16.xpose.msra.mxu0 0
    %1315 = vmatprep.subr.bf16.mxu0 0
    %1316 = vmatpush1.bf16.xpose.msra.mxu0 0
    %1317 = vmatprep.subr.bf16.mxu0 0
    %1318 = vmatpush1.bf16.xpose.msra.mxu0 0
    %1319 = vmatprep.mubr.bf16.mxu0 0
    %1320 = vmatmul.mubr.bf16.gmra.mrb[0].mxu0 %v1282
    %v1321 = vpop.f32.mrb[0].mxu0
    %v1322 = vadd.f32 0.0, %v1321
    %v1323 = vpop.f32.mrb[0].mxu0
    %v1324 = vpop.f32.mrb[0].mxu0
    %v1325 = vpop.f32.mrb[0].mxu0
    %1326 = vdwg.mxu0
    %v1327 = vsel %vm309, %v1322, -inf
    %1328 = vmax.xlane.f32.xlu0 %v1327
    %v1329 = vpop.xlane.xlu0 %1328
    %v1330 = vsub.f32 %v1322, %v1329
    %v1331 = vmul.f32 %v1330, 1.442695
    %v1332 = vpow.pop %v1331
    %v1333 = vsel %vm309, %v1332, 0.0
    %1334 = vadd.xlane.f32.xlu0 %v1333
    %v1335 = vpop.xlane.xlu0 %1334
    %v1336 = vrcp.pop %v1335
    %v1337 = vmul.f32 %v1332, %v1336
    %v1338 = vpack.c.bf16 %v1337, %v1337
    %1339 = vrot.lane.b32.xlu0 %v954, 48
    %v1340 = vpop.permute.xlu0 %1339
    %v1342 = vsel %vm309, %v1338, 0
    %v1345 = vsel %vm373, %v1340, 0
    %1347 = vmatprep.subr.bf16.mxu0 0
    %1348 = vmatpush1.bf16.msra.mxu0 %v1345
    %1349 = vmatprep.subr.bf16.mxu0 0
    %1350 = vmatpush1.bf16.msra.mxu0 0
    %1351 = vmatprep.subr.bf16.mxu0 0
    %1352 = vmatpush1.bf16.msra.mxu0 0
    %1353 = vmatprep.subr.bf16.mxu0 0
    %1354 = vmatpush1.bf16.msra.mxu0 0
    %1355 = vmatprep.subr.bf16.mxu0 0
    %1356 = vmatpush1.bf16.msra.mxu0 0
    %1357 = vmatprep.subr.bf16.mxu0 0
    %1358 = vmatpush1.bf16.msra.mxu0 0
    %1359 = vmatprep.subr.bf16.mxu0 0
    %1360 = vmatpush1.bf16.msra.mxu0 0
    %1361 = vmatprep.subr.bf16.mxu0 0
    %1362 = vmatpush1.bf16.msra.mxu0 0
    %1363 = vmatprep.subr.bf16.mxu0 0
    %1364 = vmatpush1.bf16.msra.mxu0 0
    %1365 = vmatprep.subr.bf16.mxu0 0
    %1366 = vmatpush1.bf16.msra.mxu0 0
    %1367 = vmatprep.subr.bf16.mxu0 0
    %1368 = vmatpush1.bf16.msra.mxu0 0
    %1369 = vmatprep.subr.bf16.mxu0 0
    %1370 = vmatpush1.bf16.msra.mxu0 0
    %1371 = vmatprep.subr.bf16.mxu0 0
    %1372 = vmatpush1.bf16.msra.mxu0 0
    %1373 = vmatprep.subr.bf16.mxu0 0
    %1374 = vmatpush1.bf16.msra.mxu0 0
    %1375 = vmatprep.subr.bf16.mxu0 0
    %1376 = vmatpush1.bf16.msra.mxu0 0
    %1377 = vmatprep.subr.bf16.mxu0 0
    %1378 = vmatpush1.bf16.msra.mxu0 0
    %1379 = vmatprep.mubr.bf16.mxu0 0
    %1380 = vmatmul.mubr.bf16.gmra.mrb[0].mxu0 %v1342
    %v1381 = vpop.f32.mrb[0].mxu0
    %v1382 = vadd.f32 0.0, %v1381
    %v1383 = vpop.f32.mrb[0].mxu0
    %v1384 = vpop.f32.mrb[0].mxu0
    %v1385 = vpop.f32.mrb[0].mxu0
    %1386 = vdwg.mxu0
    %v1387 = vld [vmem:[#allocation2 + $0x8] sm:$0xff]
    %v1388 = vpack.c.bf16 %v1382, %v1382
    %v1389 = vld [vmem:[#allocation11 + $0x8] sm:$0xf]
    %v1391 = vsel %vm309, %v1388, 0
    %v1394 = vsel %vm373, %v1389, 0
    %1396 = vmatprep.subr.bf16.mxu0 0
    %1397 = vmatpush1.bf16.msra.mxu0 %v1394
    %1398 = vmatprep.subr.bf16.mxu0 0
    %1399 = vmatpush1.bf16.msra.mxu0 0
    %1400 = vmatprep.subr.bf16.mxu0 0
    %1401 = vmatpush1.bf16.msra.mxu0 0
    %1402 = vmatprep.subr.bf16.mxu0 0
    %1403 = vmatpush1.bf16.msra.mxu0 0
    %1404 = vmatprep.subr.bf16.mxu0 0
    %1405 = vmatpush1.bf16.msra.mxu0 0
    %1406 = vmatprep.subr.bf16.mxu0 0
    %1407 = vmatpush1.bf16.msra.mxu0 0
    %1408 = vmatprep.subr.bf16.mxu0 0
    %1409 = vmatpush1.bf16.msra.mxu0 0
    %1410 = vmatprep.subr.bf16.mxu0 0
    %1411 = vmatpush1.bf16.msra.mxu0 0
    %1412 = vmatprep.subr.bf16.mxu0 0
    %1413 = vmatpush1.bf16.msra.mxu0 0
    %1414 = vmatprep.subr.bf16.mxu0 0
    %1415 = vmatpush1.bf16.msra.mxu0 0
    %1416 = vmatprep.subr.bf16.mxu0 0
    %1417 = vmatpush1.bf16.msra.mxu0 0
    %1418 = vmatprep.subr.bf16.mxu0 0
    %1419 = vmatpush1.bf16.msra.mxu0 0
    %1420 = vmatprep.subr.bf16.mxu0 0
    %1421 = vmatpush1.bf16.msra.mxu0 0
    %1422 = vmatprep.subr.bf16.mxu0 0
    %1423 = vmatpush1.bf16.msra.mxu0 0
    %1424 = vmatprep.subr.bf16.mxu0 0
    %1425 = vmatpush1.bf16.msra.mxu0 0
    %1426 = vmatprep.subr.bf16.mxu0 0
    %1427 = vmatpush1.bf16.msra.mxu0 0
    %1428 = vmatprep.mubr.bf16.mxu0 0
    %1429 = vmatmul.mubr.bf16.gmra.mrb[0].mxu0 %v1391
    %v1430 = vpop.f32.mrb[0].mxu0
    %v1431 = vadd.f32 0.0, %v1430
    %v1432 = vpop.f32.mrb[0].mxu0
    %v1433 = vpop.f32.mrb[0].mxu0
    %v1434 = vpop.f32.mrb[0].mxu0
    %1435 = vdwg.mxu0
    %v1436 = vadd.f32 %v1387, %v1431
    %1437 = vst.msk [vmem:[#allocation2 + $0x8] sm:$0xff] %vm194, %v1436
    %1438 = vrot.lane.b32.xlu0 %v953, 104
    %v1439 = vpop.permute.xlu0 %1438
    %1440 = vrot.lane.b32.xlu0 %v954, 72
    %v1441 = vpop.permute.xlu0 %1440
    %v1443 = vsel %vm309, %v1439, 0
    %v1446 = vsel %vm309, %v1441, 0
    %1448 = vmatprep.subr.bf16.mxu0 0
    %1449 = vmatpush1.bf16.xpose.msra.mxu0 %v1446
    %1450 = vmatprep.subr.bf16.mxu0 0
    %1451 = vmatpush1.bf16.xpose.msra.mxu0 0
    %1452 = vmatprep.subr.bf16.mxu0 0
    %1453 = vmatpush1.bf16.xpose.msra.mxu0 0
    %1454 = vmatprep.subr.bf16.mxu0 0
    %1455 = vmatpush1.bf16.xpose.msra.mxu0 0
    %1456 = vmatprep.subr.bf16.mxu0 0
    %1457 = vmatpush1.bf16.xpose.msra.mxu0 0
    %1458 = vmatprep.subr.bf16.mxu0 0
    %1459 = vmatpush1.bf16.xpose.msra.mxu0 0
    %1460 = vmatprep.subr.bf16.mxu0 0
    %1461 = vmatpush1.bf16.xpose.msra.mxu0 0
    %1462 = vmatprep.subr.bf16.mxu0 0
    %1463 = vmatpush1.bf16.xpose.msra.mxu0 0
    %1464 = vmatprep.subr.bf16.mxu0 0
    %1465 = vmatpush1.bf16.xpose.msra.mxu0 0
    %1466 = vmatprep.subr.bf16.mxu0 0
    %1467 = vmatpush1.bf16.xpose.msra.mxu0 0
    %1468 = vmatprep.subr.bf16.mxu0 0
    %1469 = vmatpush1.bf16.xpose.msra.mxu0 0
    %1470 = vmatprep.subr.bf16.mxu0 0
    %1471 = vmatpush1.bf16.xpose.msra.mxu0 0
    %1472 = vmatprep.subr.bf16.mxu0 0
    %1473 = vmatpush1.bf16.xpose.msra.mxu0 0
    %1474 = vmatprep.subr.bf16.mxu0 0
    %1475 = vmatpush1.bf16.xpose.msra.mxu0 0
    %1476 = vmatprep.subr.bf16.mxu0 0
    %1477 = vmatpush1.bf16.xpose.msra.mxu0 0
    %1478 = vmatprep.subr.bf16.mxu0 0
    %1479 = vmatpush1.bf16.xpose.msra.mxu0 0
    %1480 = vmatprep.mubr.bf16.mxu0 0
    %1481 = vmatmul.mubr.bf16.gmra.mrb[0].mxu0 %v1443
    %v1482 = vpop.f32.mrb[0].mxu0
    %v1483 = vadd.f32 0.0, %v1482
    %v1484 = vpop.f32.mrb[0].mxu0
    %v1485 = vpop.f32.mrb[0].mxu0
    %v1486 = vpop.f32.mrb[0].mxu0
    %1487 = vdwg.mxu0
    %v1488 = vsel %vm309, %v1483, -inf
    %1489 = vmax.xlane.f32.xlu0 %v1488
    %v1490 = vpop.xlane.xlu0 %1489
    %v1491 = vsub.f32 %v1483, %v1490
    %v1492 = vmul.f32 %v1491, 1.442695
    %v1493 = vpow.pop %v1492
    %v1494 = vsel %vm309, %v1493, 0.0
    %1495 = vadd.xlane.f32.xlu0 %v1494
    %v1496 = vpop.xlane.xlu0 %1495
    %v1497 = vrcp.pop %v1496
    %v1498 = vmul.f32 %v1493, %v1497
    %v1499 = vpack.c.bf16 %v1498, %v1498
    %1500 = vrot.lane.b32.xlu0 %v954, 40
    %v1501 = vpop.permute.xlu0 %1500
    %v1503 = vsel %vm309, %v1499, 0
    %v1506 = vsel %vm373, %v1501, 0
    %1508 = vmatprep.subr.bf16.mxu0 0
    %1509 = vmatpush1.bf16.msra.mxu0 %v1506
    %1510 = vmatprep.subr.bf16.mxu0 0
    %1511 = vmatpush1.bf16.msra.mxu0 0
    %1512 = vmatprep.subr.bf16.mxu0 0
    %1513 = vmatpush1.bf16.msra.mxu0 0
    %1514 = vmatprep.subr.bf16.mxu0 0
    %1515 = vmatpush1.bf16.msra.mxu0 0
    %1516 = vmatprep.subr.bf16.mxu0 0
    %1517 = vmatpush1.bf16.msra.mxu0 0
    %1518 = vmatprep.subr.bf16.mxu0 0
    %1519 = vmatpush1.bf16.msra.mxu0 0
    %1520 = vmatprep.subr.bf16.mxu0 0
    %1521 = vmatpush1.bf16.msra.mxu0 0
    %1522 = vmatprep.subr.bf16.mxu0 0
    %1523 = vmatpush1.bf16.msra.mxu0 0
    %1524 = vmatprep.subr.bf16.mxu0 0
    %1525 = vmatpush1.bf16.msra.mxu0 0
    %1526 = vmatprep.subr.bf16.mxu0 0
    %1527 = vmatpush1.bf16.msra.mxu0 0
    %1528 = vmatprep.subr.bf16.mxu0 0
    %1529 = vmatpush1.bf16.msra.mxu0 0
    %1530 = vmatprep.subr.bf16.mxu0 0
    %1531 = vmatpush1.bf16.msra.mxu0 0
    %1532 = vmatprep.subr.bf16.mxu0 0
    %1533 = vmatpush1.bf16.msra.mxu0 0
    %1534 = vmatprep.subr.bf16.mxu0 0
    %1535 = vmatpush1.bf16.msra.mxu0 0
    %1536 = vmatprep.subr.bf16.mxu0 0
    %1537 = vmatpush1.bf16.msra.mxu0 0
    %1538 = vmatprep.subr.bf16.mxu0 0
    %1539 = vmatpush1.bf16.msra.mxu0 0
    %1540 = vmatprep.mubr.bf16.mxu0 0
    %1541 = vmatmul.mubr.bf16.gmra.mrb[0].mxu0 %v1503
    %v1542 = vpop.f32.mrb[0].mxu0
    %v1543 = vadd.f32 0.0, %v1542
    %v1544 = vpop.f32.mrb[0].mxu0
    %v1545 = vpop.f32.mrb[0].mxu0
    %v1546 = vpop.f32.mrb[0].mxu0
    %1547 = vdwg.mxu0
    %v1548 = vld [vmem:[#allocation2 + $0x8] sm:$0xff]
    %v1549 = vpack.c.bf16 %v1543, %v1543
    %v1550 = vld [vmem:[#allocation11 + $0xc] sm:$0xf]
    %v1552 = vsel %vm309, %v1549, 0
    %v1555 = vsel %vm373, %v1550, 0
    %1557 = vmatprep.subr.bf16.mxu0 0
    %1558 = vmatpush1.bf16.msra.mxu0 %v1555
    %1559 = vmatprep.subr.bf16.mxu0 0
    %1560 = vmatpush1.bf16.msra.mxu0 0
    %1561 = vmatprep.subr.bf16.mxu0 0
    %1562 = vmatpush1.bf16.msra.mxu0 0
    %1563 = vmatprep.subr.bf16.mxu0 0
    %1564 = vmatpush1.bf16.msra.mxu0 0
    %1565 = vmatprep.subr.bf16.mxu0 0
    %1566 = vmatpush1.bf16.msra.mxu0 0
    %1567 = vmatprep.subr.bf16.mxu0 0
    %1568 = vmatpush1.bf16.msra.mxu0 0
    %1569 = vmatprep.subr.bf16.mxu0 0
    %1570 = vmatpush1.bf16.msra.mxu0 0
    %1571 = vmatprep.subr.bf16.mxu0 0
    %1572 = vmatpush1.bf16.msra.mxu0 0
    %1573 = vmatprep.subr.bf16.mxu0 0
    %1574 = vmatpush1.bf16.msra.mxu0 0
    %1575 = vmatprep.subr.bf16.mxu0 0
    %1576 = vmatpush1.bf16.msra.mxu0 0
    %1577 = vmatprep.subr.bf16.mxu0 0
    %1578 = vmatpush1.bf16.msra.mxu0 0
    %1579 = vmatprep.subr.bf16.mxu0 0
    %1580 = vmatpush1.bf16.msra.mxu0 0
    %1581 = vmatprep.subr.bf16.mxu0 0
    %1582 = vmatpush1.bf16.msra.mxu0 0
    %1583 = vmatprep.subr.bf16.mxu0 0
    %1584 = vmatpush1.bf16.msra.mxu0 0
    %1585 = vmatprep.subr.bf16.mxu0 0
    %1586 = vmatpush1.bf16.msra.mxu0 0
    %1587 = vmatprep.subr.bf16.mxu0 0
    %1588 = vmatpush1.bf16.msra.mxu0 0
    %1589 = vmatprep.mubr.bf16.mxu0 0
    %1590 = vmatmul.mubr.bf16.gmra.mrb[0].mxu0 %v1552
    %v1591 = vpop.f32.mrb[0].mxu0
    %v1592 = vadd.f32 0.0, %v1591
    %v1593 = vpop.f32.mrb[0].mxu0
    %v1594 = vpop.f32.mrb[0].mxu0
    %v1595 = vpop.f32.mrb[0].mxu0
    %1596 = vdwg.mxu0
    %v1597 = vadd.f32 %v1548, %v1592
    %1598 = vst.msk [vmem:[#allocation2 + $0x8] sm:$0xff] %vm194, %v1597
    %v1599 = vld [vmem:[#allocation2] sm:$0xff]
    %v1600 = vld [vmem:[#allocation2 + $0x8] sm:$0xff]
    %v1601 = vadd.f32 %v192, %v1599
    %v1602 = vadd.f32 %v193, %v1600
    %v1603 = vld [vmem:[#allocation12] sm:$0x1]
    %v1605 = vlaneseq
    %v1606 = vshrl.u32 %v1605, 7
    %v1607 = vsub.s32 0, %v1606
    %v1608 = vrot.slane %v1603, %v1607
    %v1610 = vadd.f32 %v1601, %v1608
    %v1611 = vadd.f32 %v1602, %v1608
    %v1612 = vsel %vm194, %v1610, 0.0
    %1613 = vadd.xlane.f32.xlu0 %v1612
    %v1614 = vpop.xlane.xlu0 %1613
    %v1615 = vsel %vm194, %v1611, 0.0
    %1616 = vadd.xlane.f32.xlu0 %v1615
    %v1617 = vpop.xlane.xlu0 %1616
    %v1618 = vmul.f32 %v1614, %v201
    %v1619 = vmul.f32 %v1617, %v201
    %v1620 = vsub.f32 %v1610, %v1618
    %v1621 = vsub.f32 %v1611, %v1619
    %v1622 = vmul.f32 %v1620, %v1620
    %v1623 = vmul.f32 %v1621, %v1621
    %v1624 = vsel %vm194, %v1622, 0.0
    %1625 = vadd.xlane.f32.xlu0 %v1624
    %v1626 = vpop.xlane.xlu0 %1625
    %v1627 = vsel %vm194, %v1623, 0.0
    %1628 = vadd.xlane.f32.xlu0 %v1627
    %v1629 = vpop.xlane.xlu0 %1628
    %v1630 = vmul.f32 %v1626, %v201
    %v1631 = vmul.f32 %v1629, %v201
    %v1632 = vadd.f32 %v1630, 1e-05
    %v1633 = vadd.f32 %v1631, 1e-05
    %v1634 = vrsqrt.pop %v1632
    %v1635 = vrsqrt.pop %v1633
    %v1636 = vmul.f32 %v1620, %v1634
    %v1637 = vmul.f32 %v1621, %v1635
    %v1638 = vld [vmem:[#allocation14] sm:$0x1]
    %v1640 = vlaneseq
    %v1641 = vshrl.u32 %v1640, 7
    %v1642 = vsub.s32 0, %v1641
    %v1643 = vrot.slane %v1638, %v1642
    %v1645 = vmul.f32 %v1636, %v1643
    %v1646 = vmul.f32 %v1637, %v1643
    %v1647 = vld [vmem:[#allocation15] sm:$0x1]
    %v1649 = vlaneseq
    %v1650 = vshrl.u32 %v1649, 7
    %v1651 = vsub.s32 0, %v1650
    %v1652 = vrot.slane %v1647, %v1651
    %v1654 = vadd.f32 %v1645, %v1652
    %v1655 = vadd.f32 %v1646, %v1652
    %v1656 = vpack.c.bf16 %v1655, %v1654
    %v1657 = vld [vmem:[#allocation17] sm:$0xf]
    %v1658 = vld [vmem:[#allocation17 + $0x4] sm:$0xf]
    %v1659 = vld [vmem:[#allocation17 + $0x8] sm:$0xf]
    %v1660 = vld [vmem:[#allocation17 + $0xc] sm:$0xf]
    %v1661 = vld [vmem:[#allocation18] sm:$0x1]
    %v1663 = vlaneseq
    %v1664 = vshrl.u32 %v1663, 7
    %v1665 = vsub.s32 0, %v1664
    %v1666 = vrot.slane %v1661, %v1665
    %v1672 = vunpack.c.l.b16 %v1657
    %v1673 = vunpack.c.l.b16 %v1658
    %v1674 = vunpack.c.l.b16 %v1659
    %v1675 = vunpack.c.l.b16 %v1660
    %v1676 = vpack.c.b16 %v1673, %v1672
    %v1677 = vpack.c.b16 %v1675, %v1674
    %v1681 = vsel %vm194, %v1656, 0
    %1683 = vmatprep.subr.bf16.mxu0 0
    %1684 = vmatpush1.bf16.msra.mxu0 %v1676
    %1685 = vmatprep.subr.bf16.mxu0 0
    %1686 = vmatpush1.bf16.msra.mxu0 %v1677
    %1687 = vmatprep.subr.bf16.mxu0 0
    %1688 = vmatpush1.bf16.msra.mxu0 0
    %1689 = vmatprep.subr.bf16.mxu0 0
    %1690 = vmatpush1.bf16.msra.mxu0 0
    %1691 = vmatprep.subr.bf16.mxu0 0
    %1692 = vmatpush1.bf16.msra.mxu0 0
    %1693 = vmatprep.subr.bf16.mxu0 0
    %1694 = vmatpush1.bf16.msra.mxu0 0
    %1695 = vmatprep.subr.bf16.mxu0 0
    %1696 = vmatpush1.bf16.msra.mxu0 0
    %1697 = vmatprep.subr.bf16.mxu0 0
    %1698 = vmatpush1.bf16.msra.mxu0 0
    %1699 = vmatprep.subr.bf16.mxu0 0
    %1700 = vmatpush1.bf16.msra.mxu0 0
    %1701 = vmatprep.subr.bf16.mxu0 0
    %1702 = vmatpush1.bf16.msra.mxu0 0
    %1703 = vmatprep.subr.bf16.mxu0 0
    %1704 = vmatpush1.bf16.msra.mxu0 0
    %1705 = vmatprep.subr.bf16.mxu0 0
    %1706 = vmatpush1.bf16.msra.mxu0 0
    %1707 = vmatprep.subr.bf16.mxu0 0
    %1708 = vmatpush1.bf16.msra.mxu0 0
    %1709 = vmatprep.subr.bf16.mxu0 0
    %1710 = vmatpush1.bf16.msra.mxu0 0
    %1711 = vmatprep.subr.bf16.mxu0 0
    %1712 = vmatpush1.bf16.msra.mxu0 0
    %1713 = vmatprep.subr.bf16.mxu0 0
    %1714 = vmatpush1.bf16.msra.mxu0 0
    %1715 = vmatprep.mubr.bf16.mxu0 0
    %1716 = vmatmul.mubr.bf16.gmra.mrb[0].mxu0 %v1681
    %v1717 = vpop.f32.mrb[0].mxu0
    %v1718 = vadd.f32 %v1666, %v1717
    %v1719 = vpop.f32.mrb[0].mxu0
    %v1720 = vpop.f32.mrb[0].mxu0
    %v1721 = vadd.f32 %v1666, %v1720
    %v1722 = vpop.f32.mrb[0].mxu0
    %1723 = vdwg.mxu0
    %v1724 = vmax.f32 %v1718, 0.0
    %v1725 = vmax.f32 %v1721, 0.0
    %v1726 = vpack.c.bf16 %v1725, %v1724
    %v1727 = vld [vmem:[#allocation20] sm:$0xf]
    %v1728 = vld [vmem:[#allocation20 + $0x4] sm:$0xf]
    %v1729 = vld [vmem:[#allocation20 + $0x8] sm:$0xf]
    %v1730 = vld [vmem:[#allocation20 + $0xc] sm:$0xf]
    %v1731 = vld [vmem:[#allocation20 + $0x10] sm:$0xf]
    %v1732 = vld [vmem:[#allocation20 + $0x14] sm:$0xf]
    %v1733 = vld [vmem:[#allocation20 + $0x18] sm:$0xf]
    %v1734 = vld [vmem:[#allocation20 + $0x1c] sm:$0xf]
    %v1735 = vld [vmem:[#allocation21] sm:$0x1]
    %v1737 = vlaneseq
    %v1738 = vshrl.u32 %v1737, 7
    %v1739 = vsub.s32 0, %v1738
    %v1740 = vrot.slane %v1735, %v1739
    %v1750 = vunpack.c.l.b16 %v1727
    %v1751 = vunpack.c.l.b16 %v1728
    %v1752 = vunpack.c.l.b16 %v1729
    %v1753 = vunpack.c.l.b16 %v1730
    %v1754 = vunpack.c.l.b16 %v1731
    %v1755 = vunpack.c.l.b16 %v1732
    %v1756 = vunpack.c.l.b16 %v1733
    %v1757 = vunpack.c.l.b16 %v1734
    %v1758 = vpack.c.b16 %v1751, %v1750
    %v1759 = vpack.c.b16 %v1753, %v1752
    %v1760 = vpack.c.b16 %v1755, %v1754
    %v1761 = vpack.c.b16 %v1757, %v1756
    %vm1766 = vcmask 523264
    %v1768 = vsel %vm1766, %v1726, 0
    %1770 = vmatprep.subr.bf16.mxu0 0
    %1771 = vmatpush1.bf16.msra.mxu0 %v1758
    %1772 = vmatprep.subr.bf16.mxu0 0
    %1773 = vmatpush1.bf16.msra.mxu0 %v1759
    %1774 = vmatprep.subr.bf16.mxu0 0
    %1775 = vmatpush1.bf16.msra.mxu0 %v1760
    %1776 = vmatprep.subr.bf16.mxu0 0
    %1777 = vmatpush1.bf16.msra.mxu0 %v1761
    %1778 = vmatprep.subr.bf16.mxu0 0
    %1779 = vmatpush1.bf16.msra.mxu0 0
    %1780 = vmatprep.subr.bf16.mxu0 0
    %1781 = vmatpush1.bf16.msra.mxu0 0
    %1782 = vmatprep.subr.bf16.mxu0 0
    %1783 = vmatpush1.bf16.msra.mxu0 0
    %1784 = vmatprep.subr.bf16.mxu0 0
    %1785 = vmatpush1.bf16.msra.mxu0 0
    %1786 = vmatprep.subr.bf16.mxu0 0
    %1787 = vmatpush1.bf16.msra.mxu0 0
    %1788 = vmatprep.subr.bf16.mxu0 0
    %1789 = vmatpush1.bf16.msra.mxu0 0
    %1790 = vmatprep.subr.bf16.mxu0 0
    %1791 = vmatpush1.bf16.msra.mxu0 0
    %1792 = vmatprep.subr.bf16.mxu0 0
    %1793 = vmatpush1.bf16.msra.mxu0 0
    %1794 = vmatprep.subr.bf16.mxu0 0
    %1795 = vmatpush1.bf16.msra.mxu0 0
    %1796 = vmatprep.subr.bf16.mxu0 0
    %1797 = vmatpush1.bf16.msra.mxu0 0
    %1798 = vmatprep.subr.bf16.mxu0 0
    %1799 = vmatpush1.bf16.msra.mxu0 0
    %1800 = vmatprep.subr.bf16.mxu0 0
    %1801 = vmatpush1.bf16.msra.mxu0 0
    %1802 = vmatprep.mubr.bf16.mxu0 0
    %1803 = vmatmul.mubr.bf16.gmra.mrb[0].mxu0 %v1768
    %v1804 = vpop.f32.mrb[0].mxu0
    %v1805 = vadd.f32 %v1740, %v1804
    %v1806 = vpop.f32.mrb[0].mxu0
    %v1807 = vpop.f32.mrb[0].mxu0
    %v1808 = vadd.f32 %v1740, %v1807
    %v1809 = vpop.f32.mrb[0].mxu0
    %1810 = vdwg.mxu0
    %v1811 = vadd.f32 %v1610, %v1805
    %v1812 = vadd.f32 %v1611, %v1808
    %1813 = vst.msk [vmem:[#allocation23] sm:$0xff] %vm194, %v1811
    %1814 = vst.msk [vmem:[#allocation23 + $0x8] sm:$0xff] %vm194, %v1812
    // Predicated region
    $region98: #{tpu_custom_call.1} parent=1 // pred_check
      _
    $region99: #{tpu_custom_call.1} parent=1 // pred_check_branch
      %1816 = sbr.rel (0) target = $region101
    $region100: #{tpu_custom_call.1} parent=1 // pred_region
      %s1818 = ssub.s32 256, 256
      %1819 = vsyncadd [#allocation5], %s1818
      %s1820 = sshll.u32 [#allocation23], 4
      %s1821 = int_to_ptr.vmem [resolvable:$true] %s1820
      %1826 = dma.vmem_to_hbm [thread:$0]  %s1821, 256, %s12, [#allocation5], 128, 128, 8
    $region101: #{tpu_custom_call.1} parent=1 // pred_fallthru
      _
    // Predicated region
    $region102: #{tpu_custom_call.1} parent=1 // pred_check
      _
    $region103: #{tpu_custom_call.1} parent=1 // pred_check_branch
      %1828 = sbr.rel (0) target = $region105
    $region104: #{tpu_custom_call.1} parent=1 // pred_region
      %1829 = dma.done [#allocation5], 256
    $region105: #{tpu_custom_call.1} parent=1 // pred_fallthru
      _
    %1830 = vsyncpa [#allocation4], 1
    %1831 = vsyncpa [#allocation7], 1
    %1832 = vsyncpa [#allocation10], 1
    %1833 = vsyncpa [#allocation13], 1
    %1834 = vsyncpa [#allocation16], 1
    %1835 = vsyncpa [#allocation19], 1
    %1836 = vsyncpa [#allocation22], 1
    %1837 = vsyncpa [#allocation5], 1

</llo_original>
